<compile_context>
chip_gen: v6e
topology: v6e:2x2x1
jax: 0.10.0
libtpu: 0.0.40
codegen_flags: <defaults>
</compile_context>

<pallas_src>
import numpy as np
import jax
import jax.numpy as jnp
from jax import lax
from jax.experimental import pallas as pl
from jax.experimental.pallas import tpu as pltpu

C_IN = 16
C_OUT = 16
KH = KW = 3
CENTER_TAP = (KH // 2) * KW + (KW // 2)   # tap (1,1): its mask is all ones


def _make_border_masks(H, W):
    """(KH*KW, C_IN, H*W) f32 masks: 1 where the shifted tap stays in-image.

    Pre-broadcast over C_IN on the host so the kernel does plain vreg
    multiplies (JAX does not CSE broadcast_in_dim inside the kernel).
    """
    HW = H * W
    hh, ww = np.meshgrid(np.arange(H), np.arange(W), indexing="ij")
    masks = np.zeros((KH * KW, HW), np.float32)
    for kh in range(KH):
        for kw in range(KW):
            dh, dw = kh - 1, kw - 1
            valid = ((hh + dh >= 0) & (hh + dh < H) &
                     (ww + dw >= 0) & (ww + dw < W))
            masks[kh * KW + kw] = valid.reshape(HW).astype(np.float32)
    masks = np.ascontiguousarray(
        np.broadcast_to(masks[:, None, :], (KH * KW, C_IN, HW)))
    return jnp.asarray(masks)


def _pick_batch_tile(n):
    """Images folded into one grid step.

    v7x has 2 TensorCores/chip -> keep >= 2 parallel grid steps so both get
    work.  v5e/v6e have 1 TC -> fold the whole (small) batch into one step to
    amortize per-step overhead and widen the matmul lane dimension.
    """
    kind = ""
    try:
        kind = jax.devices()[0].device_kind.lower()
    except Exception:
        pass
    n_cores = 2 if "v7" in kind else 1
    bt = max(1, n // n_cores) if n >= n_cores else max(1, n)
    bt = min(bt, 8)            # lane-width / im2col-scratch (VMEM) guard
    while n % bt:              # keep the grid exact (no partial blocks)
        bt -= 1
    return bt


def resblock_nchw(x, w1, b1, w2, b2, batch_tile=None):
    """x: (N, C, H, W) f32; w*: (Cout, Cin, 3, 3) PyTorch OIHW; b*: (Cout,)."""
    N, C, H, W = x.shape
    assert C == C_IN
    HW = H * W
    assert HW % 128 == 0, "lane-dense layout needs H*W to be a multiple of 128"
    BT = _pick_batch_tile(N) if batch_tile is None else batch_tile
    assert N % BT == 0

    # Fold the 9 taps into the contraction dim: (Cout, Cin, KH, KW) ->
    # (Cout, KH*KW*Cin), row order (kh, kw, ci) matching the patch matrix.
    w1_mat = jnp.transpose(w1, (0, 2, 3, 1)).reshape(C_OUT, KH * KW * C_IN)
    w2_mat = jnp.transpose(w2, (0, 2, 3, 1)).reshape(C_OUT, KH * KW * C_IN)
    b1_col = b1.reshape(C_OUT, 1)
    b2_col = b2.reshape(C_OUT, 1)
    masks = _make_border_masks(H, W)
    x_flat = x.reshape(N, C, HW)        # free reshape, stays NCHW-contiguous

    def kernel(x_ref, mask_ref, w1_ref, b1_ref, w2_ref, b2_ref,
               out_ref, patches_ref):
        # x_ref:       (BT, C_IN, HW)
        # mask_ref:    (KH*KW, C_IN, HW)        grid-invariant
        # w*_ref:      (C_OUT, KH*KW*C_IN)      grid-invariant
        # b*_ref:      (C_OUT, 1)               grid-invariant
        # out_ref:     (BT, C_OUT, HW)
        # patches_ref: (KH*KW*C_IN, BT*HW) f32 scratch (batched im2col)

        def build_patches(src, b):
            # Fill columns [b*HW, (b+1)*HW) with the 9 shifted+masked copies
            # of `src` (C_IN, HW).  Two +-W row rolls, then +-1 lane rolls.
            rows = (pltpu.roll(src, shift=W, axis=1),       # dh = -1
                    src,                                    # dh =  0
                    pltpu.roll(src, shift=HW - W, axis=1))  # dh = +1
            for kh in range(KH):
                base = rows[kh]
                for kw in range(KW):
                    dw = kw - 1
                    if dw == 0:
                        shifted = base
                    elif dw == -1:
                        shifted = pltpu.roll(base, shift=1, axis=1)
                    else:
                        shifted = pltpu.roll(base, shift=HW - 1, axis=1)
                    t = kh * KW + kw
                    if t != CENTER_TAP:          # centre mask is all ones
                        shifted = shifted * mask_ref[t]
                    patches_ref[t * C_IN:(t + 1) * C_IN,
                                b * HW:(b + 1) * HW] = shifted

        # ---- conv1: one K=144 matmul over all BT images, + bias, ReLU ----
        for b in range(BT):
            build_patches(x_ref[b], b)
        y1 = jnp.dot(w1_ref[...], patches_ref[...],
                     preferred_element_type=jnp.float32)     # (C_OUT, BT*HW)
        y1 = jnp.maximum(y1 + b1_ref[...], 0.0)

        # ---- conv2: one K=144 matmul, + bias, + residual, write-back ----
        for b in range(BT):
            build_patches(y1[:, b * HW:(b + 1) * HW], b)
        y2 = jnp.dot(w2_ref[...], patches_ref[...],
                     preferred_element_type=jnp.float32)     # (C_OUT, BT*HW)
        y2 = y2 + b2_ref[...]
        for b in range(BT):
            out_ref[b] = (y2[:, b * HW:(b + 1) * HW]
                          + x_ref[b]).astype(out_ref.dtype)

    out_flat = pl.pallas_call(
        kernel,
        out_shape=jax.ShapeDtypeStruct((N, C_OUT, HW), x.dtype),
        grid_spec=pltpu.PrefetchScalarGridSpec(
            num_scalar_prefetch=0,
            grid=(N // BT,),
            in_specs=[
                pl.BlockSpec((BT, C_IN, HW), lambda n: (n, 0, 0)),
                # Constant index_maps: fetched once, reused every step.
                pl.BlockSpec((KH * KW, C_IN, HW), lambda n: (0, 0, 0)),
                pl.BlockSpec((C_OUT, KH * KW * C_IN), lambda n: (0, 0)),
                pl.BlockSpec((C_OUT, 1), lambda n: (0, 0)),
                pl.BlockSpec((C_OUT, KH * KW * C_IN), lambda n: (0, 0)),
                pl.BlockSpec((C_OUT, 1), lambda n: (0, 0)),
            ],
            out_specs=pl.BlockSpec((BT, C_OUT, HW), lambda n: (n, 0, 0)),
            scratch_shapes=[
                pltpu.VMEM((KH * KW * C_IN, BT * HW), jnp.float32)],
        ),
        compiler_params=pltpu.CompilerParams(
            dimension_semantics=("parallel",),
            vmem_limit_bytes=32 * 1024 * 1024),
    )(x_flat, masks, w1_mat, b1_col, w2_mat, b2_col)

    return out_flat.reshape(N, C_OUT, H, W)


def ref_forward_nchw(x, w1, b1, w2, b2):
    dn = ("NCHW", "OIHW", "NCHW")
    y = lax.conv_general_dilated(x, w1, (1, 1), "SAME", dimension_numbers=dn,
                                 precision=lax.Precision.HIGHEST)
    y = jnp.maximum(y + b1.reshape(1, -1, 1, 1), 0.0)
    y = lax.conv_general_dilated(y, w2, (1, 1), "SAME", dimension_numbers=dn,
                                 precision=lax.Precision.HIGHEST)
    return y + b2.reshape(1, -1, 1, 1) + x


def init_params(key):
    # PyTorch Conv2d default init: U(-1/sqrt(fan_in), 1/sqrt(fan_in)),
    # fan_in = Cin * kH * kW.  Weights in PyTorch OIHW layout.
    fan_in = C_IN * KH * KW
    bound = 1.0 / jnp.sqrt(jnp.float32(fan_in))
    k1, k2, k3, k4 = jax.random.split(key, 4)
    w1 = jax.random.uniform(k1, (C_OUT, C_IN, KH, KW), jnp.float32, -bound, bound)
    b1 = jax.random.uniform(k2, (C_OUT,), jnp.float32, -bound, bound)
    w2 = jax.random.uniform(k3, (C_OUT, C_IN, KH, KW), jnp.float32, -bound, bound)
    b2 = jax.random.uniform(k4, (C_OUT,), jnp.float32, -bound, bound)
    return w1, b1, w2, b2


if __name__ == "__main__":
    key = jax.random.PRNGKey(0)
    kx, kp = jax.random.split(key)

    # Conv2d(16, 16, ...) => C = 16.
    N, C, H, W = 2, 16, 16, 16
    x = jax.random.normal(kx, (N, C, H, W), jnp.float32)   # NCHW like PyTorch
    w1, b1, w2, b2 = init_params(kp)

    out = jax.block_until_ready(resblock_nchw(x, w1, b1, w2, b2))

    ref = ref_forward_nchw(x, w1, b1, w2, b2)
    assert out.shape == (N, C, H, W)
    err = float(jnp.max(jnp.abs(out - ref)))
    assert jnp.allclose(out, ref, rtol=1e-3, atol=1e-3), err

    print("KERNEL_OK")
</pallas_src>

<mosaic_0001>
module attributes {stable_mosaic.version = 11 : i64} {
  func.func @kernel(%arg0: i32, %arg1: memref<2x16x256xf32, #tpu.memory_space<vmem>>, %arg2: memref<9x16x256xf32, #tpu.memory_space<vmem>>, %arg3: memref<16x144xf32, #tpu.memory_space<vmem>>, %arg4: memref<16x1xf32, #tpu.memory_space<vmem>>, %arg5: memref<16x144xf32, #tpu.memory_space<vmem>>, %arg6: memref<16x1xf32, #tpu.memory_space<vmem>>, %arg7: memref<2x16x256xf32, #tpu.memory_space<vmem>>, %arg8: memref<144x512xf32, #tpu.memory_space<vmem>>) attributes {dimension_semantics = [#tpu.dimension_semantics<parallel>], iteration_bounds = array<i64: 1>, scalar_prefetch = 0 : i64, scratch_operands = 1 : i64, tpu.core_type = #tpu.core_type<tc>, window_params = [{transform_indices = @transform_0, window_bounds = array<i64: 2, 16, 256>}, {pipeline_mode = #tpu.pipeline_mode<synchronous>, transform_indices = @transform_1, window_bounds = array<i64: 9, 16, 256>}, {pipeline_mode = #tpu.pipeline_mode<synchronous>, transform_indices = @transform_2, window_bounds = array<i64: 16, 144>}, {pipeline_mode = #tpu.pipeline_mode<synchronous>, transform_indices = @transform_3, window_bounds = array<i64: 16, 1>}, {pipeline_mode = #tpu.pipeline_mode<synchronous>, transform_indices = @transform_4, window_bounds = array<i64: 16, 144>}, {pipeline_mode = #tpu.pipeline_mode<synchronous>, transform_indices = @transform_5, window_bounds = array<i64: 16, 1>}, {transform_indices = @transform_6, window_bounds = array<i64: 2, 16, 256>}]} {
    %c0 = arith.constant 0 : index
    %c0_0 = arith.constant 0 : index
    %c0_1 = arith.constant 0 : index
    %0 = vector.load %arg1[%c0, %c0_0, %c0_1] : memref<2x16x256xf32, #tpu.memory_space<vmem>>, vector<1x16x256xf32>
    %1 = vector.shape_cast %0 : vector<1x16x256xf32> to vector<16x256xf32>
    %c16_i32 = arith.constant 16 : i32
    %2 = tpu.dynamic_rotate %1 by %c16_i32 dim 1 : vector<16x256xf32>, i32 -> vector<16x256xf32>
    %c240_i32 = arith.constant 240 : i32
    %3 = tpu.dynamic_rotate %1 by %c240_i32 dim 1 : vector<16x256xf32>, i32 -> vector<16x256xf32>
    %c1_i32 = arith.constant 1 : i32
    %4 = tpu.dynamic_rotate %2 by %c1_i32 dim 1 : vector<16x256xf32>, i32 -> vector<16x256xf32>
    %c0_2 = arith.constant 0 : index
    %c0_3 = arith.constant 0 : index
    %c0_4 = arith.constant 0 : index
    %5 = vector.load %arg2[%c0_2, %c0_3, %c0_4] : memref<9x16x256xf32, #tpu.memory_space<vmem>>, vector<1x16x256xf32>
    %6 = vector.shape_cast %5 : vector<1x16x256xf32> to vector<16x256xf32>
    %7 = arith.mulf %4, %6 : vector<16x256xf32>
    %c0_5 = arith.constant 0 : index
    %c0_6 = arith.constant 0 : index
    %8 = vector.load %arg8[%c0_5, %c0_6] : memref<144x512xf32, #tpu.memory_space<vmem>>, vector<16x256xf32>
    tpu.vector_store %arg8[%c0_5, %c0_6], %7 {strides = array<i32>} : memref<144x512xf32, #tpu.memory_space<vmem>>, vector<16x256xf32>,
    %c1 = arith.constant 1 : index
    %c0_7 = arith.constant 0 : index
    %c0_8 = arith.constant 0 : index
    %9 = vector.load %arg2[%c1, %c0_7, %c0_8] : memref<9x16x256xf32, #tpu.memory_space<vmem>>, vector<1x16x256xf32>
    %10 = vector.shape_cast %9 : vector<1x16x256xf32> to vector<16x256xf32>
    %11 = arith.mulf %2, %10 : vector<16x256xf32>
    %c16 = arith.constant 16 : index
    %c0_9 = arith.constant 0 : index
    %12 = vector.load %arg8[%c16, %c0_9] : memref<144x512xf32, #tpu.memory_space<vmem>>, vector<16x256xf32>
    tpu.vector_store %arg8[%c16, %c0_9], %11 {strides = array<i32>} : memref<144x512xf32, #tpu.memory_space<vmem>>, vector<16x256xf32>,
    %c255_i32 = arith.constant 255 : i32
    %13 = tpu.dynamic_rotate %2 by %c255_i32 dim 1 : vector<16x256xf32>, i32 -> vector<16x256xf32>
    %c2 = arith.constant 2 : index
    %c0_10 = arith.constant 0 : index
    %c0_11 = arith.constant 0 : index
    %14 = vector.load %arg2[%c2, %c0_10, %c0_11] : memref<9x16x256xf32, #tpu.memory_space<vmem>>, vector<1x16x256xf32>
    %15 = vector.shape_cast %14 : vector<1x16x256xf32> to vector<16x256xf32>
    %16 = arith.mulf %13, %15 : vector<16x256xf32>
    %c32 = arith.constant 32 : index
    %c0_12 = arith.constant 0 : index
    %17 = vector.load %arg8[%c32, %c0_12] : memref<144x512xf32, #tpu.memory_space<vmem>>, vector<16x256xf32>
    tpu.vector_store %arg8[%c32, %c0_12], %16 {strides = array<i32>} : memref<144x512xf32, #tpu.memory_space<vmem>>, vector<16x256xf32>,
    %c1_i32_13 = arith.constant 1 : i32
    %18 = tpu.dynamic_rotate %1 by %c1_i32_13 dim 1 : vector<16x256xf32>, i32 -> vector<16x256xf32>
    %c3 = arith.constant 3 : index
    %c0_14 = arith.constant 0 : index
    %c0_15 = arith.constant 0 : index
    %19 = vector.load %arg2[%c3, %c0_14, %c0_15] : memref<9x16x256xf32, #tpu.memory_space<vmem>>, vector<1x16x256xf32>
    %20 = vector.shape_cast %19 : vector<1x16x256xf32> to vector<16x256xf32>
    %21 = arith.mulf %18, %20 : vector<16x256xf32>
    %c48 = arith.constant 48 : index
    %c0_16 = arith.constant 0 : index
    %22 = vector.load %arg8[%c48, %c0_16] : memref<144x512xf32, #tpu.memory_space<vmem>>, vector<16x256xf32>
    tpu.vector_store %arg8[%c48, %c0_16], %21 {strides = array<i32>} : memref<144x512xf32, #tpu.memory_space<vmem>>, vector<16x256xf32>,
    %c64 = arith.constant 64 : index
    %c0_17 = arith.constant 0 : index
    %23 = vector.load %arg8[%c64, %c0_17] : memref<144x512xf32, #tpu.memory_space<vmem>>, vector<16x256xf32>
    tpu.vector_store %arg8[%c64, %c0_17], %1 {strides = array<i32>} : memref<144x512xf32, #tpu.memory_space<vmem>>, vector<16x256xf32>,
    %c255_i32_18 = arith.constant 255 : i32
    %24 = tpu.dynamic_rotate %1 by %c255_i32_18 dim 1 : vector<16x256xf32>, i32 -> vector<16x256xf32>
    %c5 = arith.constant 5 : index
    %c0_19 = arith.constant 0 : index
    %c0_20 = arith.constant 0 : index
    %25 = vector.load %arg2[%c5, %c0_19, %c0_20] : memref<9x16x256xf32, #tpu.memory_space<vmem>>, vector<1x16x256xf32>
    %26 = vector.shape_cast %25 : vector<1x16x256xf32> to vector<16x256xf32>
    %27 = arith.mulf %24, %26 : vector<16x256xf32>
    %c80 = arith.constant 80 : index
    %c0_21 = arith.constant 0 : index
    %28 = vector.load %arg8[%c80, %c0_21] : memref<144x512xf32, #tpu.memory_space<vmem>>, vector<16x256xf32>
    tpu.vector_store %arg8[%c80, %c0_21], %27 {strides = array<i32>} : memref<144x512xf32, #tpu.memory_space<vmem>>, vector<16x256xf32>,
    %c1_i32_22 = arith.constant 1 : i32
    %29 = tpu.dynamic_rotate %3 by %c1_i32_22 dim 1 : vector<16x256xf32>, i32 -> vector<16x256xf32>
    %c6 = arith.constant 6 : index
    %c0_23 = arith.constant 0 : index
    %c0_24 = arith.constant 0 : index
    %30 = vector.load %arg2[%c6, %c0_23, %c0_24] : memref<9x16x256xf32, #tpu.memory_space<vmem>>, vector<1x16x256xf32>
    %31 = vector.shape_cast %30 : vector<1x16x256xf32> to vector<16x256xf32>
    %32 = arith.mulf %29, %31 : vector<16x256xf32>
    %c96 = arith.constant 96 : index
    %c0_25 = arith.constant 0 : index
    %33 = vector.load %arg8[%c96, %c0_25] : memref<144x512xf32, #tpu.memory_space<vmem>>, vector<16x256xf32>
    tpu.vector_store %arg8[%c96, %c0_25], %32 {strides = array<i32>} : memref<144x512xf32, #tpu.memory_space<vmem>>, vector<16x256xf32>,
    %c7 = arith.constant 7 : index
    %c0_26 = arith.constant 0 : index
    %c0_27 = arith.constant 0 : index
    %34 = vector.load %arg2[%c7, %c0_26, %c0_27] : memref<9x16x256xf32, #tpu.memory_space<vmem>>, vector<1x16x256xf32>
    %35 = vector.shape_cast %34 : vector<1x16x256xf32> to vector<16x256xf32>
    %36 = arith.mulf %3, %35 : vector<16x256xf32>
    %c112 = arith.constant 112 : index
    %c0_28 = arith.constant 0 : index
    %37 = vector.load %arg8[%c112, %c0_28] : memref<144x512xf32, #tpu.memory_space<vmem>>, vector<16x256xf32>
    tpu.vector_store %arg8[%c112, %c0_28], %36 {strides = array<i32>} : memref<144x512xf32, #tpu.memory_space<vmem>>, vector<16x256xf32>,
    %c255_i32_29 = arith.constant 255 : i32
    %38 = tpu.dynamic_rotate %3 by %c255_i32_29 dim 1 : vector<16x256xf32>, i32 -> vector<16x256xf32>
    %c8 = arith.constant 8 : index
    %c0_30 = arith.constant 0 : index
    %c0_31 = arith.constant 0 : index
    %39 = vector.load %arg2[%c8, %c0_30, %c0_31] : memref<9x16x256xf32, #tpu.memory_space<vmem>>, vector<1x16x256xf32>
    %40 = vector.shape_cast %39 : vector<1x16x256xf32> to vector<16x256xf32>
    %41 = arith.mulf %38, %40 : vector<16x256xf32>
    %c128 = arith.constant 128 : index
    %c0_32 = arith.constant 0 : index
    %42 = vector.load %arg8[%c128, %c0_32] : memref<144x512xf32, #tpu.memory_space<vmem>>, vector<16x256xf32>
    tpu.vector_store %arg8[%c128, %c0_32], %41 {strides = array<i32>} : memref<144x512xf32, #tpu.memory_space<vmem>>, vector<16x256xf32>,
    %c1_33 = arith.constant 1 : index
    %c0_34 = arith.constant 0 : index
    %c0_35 = arith.constant 0 : index
    %43 = vector.load %arg1[%c1_33, %c0_34, %c0_35] : memref<2x16x256xf32, #tpu.memory_space<vmem>>, vector<1x16x256xf32>
    %44 = vector.shape_cast %43 : vector<1x16x256xf32> to vector<16x256xf32>
    %c16_i32_36 = arith.constant 16 : i32
    %45 = tpu.dynamic_rotate %44 by %c16_i32_36 dim 1 : vector<16x256xf32>, i32 -> vector<16x256xf32>
    %c240_i32_37 = arith.constant 240 : i32
    %46 = tpu.dynamic_rotate %44 by %c240_i32_37 dim 1 : vector<16x256xf32>, i32 -> vector<16x256xf32>
    %c1_i32_38 = arith.constant 1 : i32
    %47 = tpu.dynamic_rotate %45 by %c1_i32_38 dim 1 : vector<16x256xf32>, i32 -> vector<16x256xf32>
    %c0_39 = arith.constant 0 : index
    %c0_40 = arith.constant 0 : index
    %c0_41 = arith.constant 0 : index
    %48 = vector.load %arg2[%c0_39, %c0_40, %c0_41] : memref<9x16x256xf32, #tpu.memory_space<vmem>>, vector<1x16x256xf32>
    %49 = vector.shape_cast %48 : vector<1x16x256xf32> to vector<16x256xf32>
    %50 = arith.mulf %47, %49 : vector<16x256xf32>
    %c0_42 = arith.constant 0 : index
    %c256 = arith.constant 256 : index
    %51 = vector.load %arg8[%c0_42, %c256] : memref<144x512xf32, #tpu.memory_space<vmem>>, vector<16x256xf32>
    tpu.vector_store %arg8[%c0_42, %c256], %50 {strides = array<i32>} : memref<144x512xf32, #tpu.memory_space<vmem>>, vector<16x256xf32>,
    %c1_43 = arith.constant 1 : index
    %c0_44 = arith.constant 0 : index
    %c0_45 = arith.constant 0 : index
    %52 = vector.load %arg2[%c1_43, %c0_44, %c0_45] : memref<9x16x256xf32, #tpu.memory_space<vmem>>, vector<1x16x256xf32>
    %53 = vector.shape_cast %52 : vector<1x16x256xf32> to vector<16x256xf32>
    %54 = arith.mulf %45, %53 : vector<16x256xf32>
    %c16_46 = arith.constant 16 : index
    %c256_47 = arith.constant 256 : index
    %55 = vector.load %arg8[%c16_46, %c256_47] : memref<144x512xf32, #tpu.memory_space<vmem>>, vector<16x256xf32>
    tpu.vector_store %arg8[%c16_46, %c256_47], %54 {strides = array<i32>} : memref<144x512xf32, #tpu.memory_space<vmem>>, vector<16x256xf32>,
    %c255_i32_48 = arith.constant 255 : i32
    %56 = tpu.dynamic_rotate %45 by %c255_i32_48 dim 1 : vector<16x256xf32>, i32 -> vector<16x256xf32>
    %c2_49 = arith.constant 2 : index
    %c0_50 = arith.constant 0 : index
    %c0_51 = arith.constant 0 : index
    %57 = vector.load %arg2[%c2_49, %c0_50, %c0_51] : memref<9x16x256xf32, #tpu.memory_space<vmem>>, vector<1x16x256xf32>
    %58 = vector.shape_cast %57 : vector<1x16x256xf32> to vector<16x256xf32>
    %59 = arith.mulf %56, %58 : vector<16x256xf32>
    %c32_52 = arith.constant 32 : index
    %c256_53 = arith.constant 256 : index
    %60 = vector.load %arg8[%c32_52, %c256_53] : memref<144x512xf32, #tpu.memory_space<vmem>>, vector<16x256xf32>
    tpu.vector_store %arg8[%c32_52, %c256_53], %59 {strides = array<i32>} : memref<144x512xf32, #tpu.memory_space<vmem>>, vector<16x256xf32>,
    %c1_i32_54 = arith.constant 1 : i32
    %61 = tpu.dynamic_rotate %44 by %c1_i32_54 dim 1 : vector<16x256xf32>, i32 -> vector<16x256xf32>
    %c3_55 = arith.constant 3 : index
    %c0_56 = arith.constant 0 : index
    %c0_57 = arith.constant 0 : index
    %62 = vector.load %arg2[%c3_55, %c0_56, %c0_57] : memref<9x16x256xf32, #tpu.memory_space<vmem>>, vector<1x16x256xf32>
    %63 = vector.shape_cast %62 : vector<1x16x256xf32> to vector<16x256xf32>
    %64 = arith.mulf %61, %63 : vector<16x256xf32>
    %c48_58 = arith.constant 48 : index
    %c256_59 = arith.constant 256 : index
    %65 = vector.load %arg8[%c48_58, %c256_59] : memref<144x512xf32, #tpu.memory_space<vmem>>, vector<16x256xf32>
    tpu.vector_store %arg8[%c48_58, %c256_59], %64 {strides = array<i32>} : memref<144x512xf32, #tpu.memory_space<vmem>>, vector<16x256xf32>,
    %c64_60 = arith.constant 64 : index
    %c256_61 = arith.constant 256 : index
    %66 = vector.load %arg8[%c64_60, %c256_61] : memref<144x512xf32, #tpu.memory_space<vmem>>, vector<16x256xf32>
    tpu.vector_store %arg8[%c64_60, %c256_61], %44 {strides = array<i32>} : memref<144x512xf32, #tpu.memory_space<vmem>>, vector<16x256xf32>,
    %c255_i32_62 = arith.constant 255 : i32
    %67 = tpu.dynamic_rotate %44 by %c255_i32_62 dim 1 : vector<16x256xf32>, i32 -> vector<16x256xf32>
    %c5_63 = arith.constant 5 : index
    %c0_64 = arith.constant 0 : index
    %c0_65 = arith.constant 0 : index
    %68 = vector.load %arg2[%c5_63, %c0_64, %c0_65] : memref<9x16x256xf32, #tpu.memory_space<vmem>>, vector<1x16x256xf32>
    %69 = vector.shape_cast %68 : vector<1x16x256xf32> to vector<16x256xf32>
    %70 = arith.mulf %67, %69 : vector<16x256xf32>
    %c80_66 = arith.constant 80 : index
    %c256_67 = arith.constant 256 : index
    %71 = vector.load %arg8[%c80_66, %c256_67] : memref<144x512xf32, #tpu.memory_space<vmem>>, vector<16x256xf32>
    tpu.vector_store %arg8[%c80_66, %c256_67], %70 {strides = array<i32>} : memref<144x512xf32, #tpu.memory_space<vmem>>, vector<16x256xf32>,
    %c1_i32_68 = arith.constant 1 : i32
    %72 = tpu.dynamic_rotate %46 by %c1_i32_68 dim 1 : vector<16x256xf32>, i32 -> vector<16x256xf32>
    %c6_69 = arith.constant 6 : index
    %c0_70 = arith.constant 0 : index
    %c0_71 = arith.constant 0 : index
    %73 = vector.load %arg2[%c6_69, %c0_70, %c0_71] : memref<9x16x256xf32, #tpu.memory_space<vmem>>, vector<1x16x256xf32>
    %74 = vector.shape_cast %73 : vector<1x16x256xf32> to vector<16x256xf32>
    %75 = arith.mulf %72, %74 : vector<16x256xf32>
    %c96_72 = arith.constant 96 : index
    %c256_73 = arith.constant 256 : index
    %76 = vector.load %arg8[%c96_72, %c256_73] : memref<144x512xf32, #tpu.memory_space<vmem>>, vector<16x256xf32>
    tpu.vector_store %arg8[%c96_72, %c256_73], %75 {strides = array<i32>} : memref<144x512xf32, #tpu.memory_space<vmem>>, vector<16x256xf32>,
    %c7_74 = arith.constant 7 : index
    %c0_75 = arith.constant 0 : index
    %c0_76 = arith.constant 0 : index
    %77 = vector.load %arg2[%c7_74, %c0_75, %c0_76] : memref<9x16x256xf32, #tpu.memory_space<vmem>>, vector<1x16x256xf32>
    %78 = vector.shape_cast %77 : vector<1x16x256xf32> to vector<16x256xf32>
    %79 = arith.mulf %46, %78 : vector<16x256xf32>
    %c112_77 = arith.constant 112 : index
    %c256_78 = arith.constant 256 : index
    %80 = vector.load %arg8[%c112_77, %c256_78] : memref<144x512xf32, #tpu.memory_space<vmem>>, vector<16x256xf32>
    tpu.vector_store %arg8[%c112_77, %c256_78], %79 {strides = array<i32>} : memref<144x512xf32, #tpu.memory_space<vmem>>, vector<16x256xf32>,
    %c255_i32_79 = arith.constant 255 : i32
    %81 = tpu.dynamic_rotate %46 by %c255_i32_79 dim 1 : vector<16x256xf32>, i32 -> vector<16x256xf32>
    %c8_80 = arith.constant 8 : index
    %c0_81 = arith.constant 0 : index
    %c0_82 = arith.constant 0 : index
    %82 = vector.load %arg2[%c8_80, %c0_81, %c0_82] : memref<9x16x256xf32, #tpu.memory_space<vmem>>, vector<1x16x256xf32>
    %83 = vector.shape_cast %82 : vector<1x16x256xf32> to vector<16x256xf32>
    %84 = arith.mulf %81, %83 : vector<16x256xf32>
    %c128_83 = arith.constant 128 : index
    %c256_84 = arith.constant 256 : index
    %85 = vector.load %arg8[%c128_83, %c256_84] : memref<144x512xf32, #tpu.memory_space<vmem>>, vector<16x256xf32>
    tpu.vector_store %arg8[%c128_83, %c256_84], %84 {strides = array<i32>} : memref<144x512xf32, #tpu.memory_space<vmem>>, vector<16x256xf32>,
    %c0_85 = arith.constant 0 : index
    %c0_86 = arith.constant 0 : index
    %86 = vector.load %arg3[%c0_85, %c0_86] : memref<16x144xf32, #tpu.memory_space<vmem>>, vector<16x144xf32>
    %c0_87 = arith.constant 0 : index
    %c0_88 = arith.constant 0 : index
    %87 = vector.load %arg8[%c0_87, %c0_88] : memref<144x512xf32, #tpu.memory_space<vmem>>, vector<144x512xf32>
    %cst = arith.constant dense<0.000000e+00> : vector<16x512xf32>
    %88 = tpu.matmul %86, %87, %cst {dimension_numbers = #tpu.dot_dimension_numbers<[1], [0], [0], [1], [0, 0, 1, 1], [], []>} : vector<16x144xf32>, vector<144x512xf32>, vector<16x512xf32> -> vector<16x512xf32>
    %c0_89 = arith.constant 0 : index
    %c0_90 = arith.constant 0 : index
    %89 = vector.load %arg4[%c0_89, %c0_90] : memref<16x1xf32, #tpu.memory_space<vmem>>, vector<16x1xf32>
    %90 = vector.broadcast %89 : vector<16x1xf32> to vector<16x512xf32>
    %91 = arith.addf %88, %90 : vector<16x512xf32>
    %cst_91 = arith.constant 0.000000e+00 : f32
    %92 = vector.broadcast %cst_91 : f32 to vector<16x512xf32>
    %93 = arith.maximumf %91, %92 : vector<16x512xf32>
    %94 = vector.extract_strided_slice %93 {offsets = [0, 0], sizes = [16, 256], strides = [1, 1]} : vector<16x512xf32> to vector<16x256xf32>
    %c16_i32_92 = arith.constant 16 : i32
    %95 = tpu.dynamic_rotate %94 by %c16_i32_92 dim 1 : vector<16x256xf32>, i32 -> vector<16x256xf32>
    %c240_i32_93 = arith.constant 240 : i32
    %96 = tpu.dynamic_rotate %94 by %c240_i32_93 dim 1 : vector<16x256xf32>, i32 -> vector<16x256xf32>
    %c1_i32_94 = arith.constant 1 : i32
    %97 = tpu.dynamic_rotate %95 by %c1_i32_94 dim 1 : vector<16x256xf32>, i32 -> vector<16x256xf32>
    %c0_95 = arith.constant 0 : index
    %c0_96 = arith.constant 0 : index
    %c0_97 = arith.constant 0 : index
    %98 = vector.load %arg2[%c0_95, %c0_96, %c0_97] : memref<9x16x256xf32, #tpu.memory_space<vmem>>, vector<1x16x256xf32>
    %99 = vector.shape_cast %98 : vector<1x16x256xf32> to vector<16x256xf32>
    %100 = arith.mulf %97, %99 : vector<16x256xf32>
    %c0_98 = arith.constant 0 : index
    %c0_99 = arith.constant 0 : index
    %101 = vector.load %arg8[%c0_98, %c0_99] : memref<144x512xf32, #tpu.memory_space<vmem>>, vector<16x256xf32>
    tpu.vector_store %arg8[%c0_98, %c0_99], %100 {strides = array<i32>} : memref<144x512xf32, #tpu.memory_space<vmem>>, vector<16x256xf32>,
    %c1_100 = arith.constant 1 : index
    %c0_101 = arith.constant 0 : index
    %c0_102 = arith.constant 0 : index
    %102 = vector.load %arg2[%c1_100, %c0_101, %c0_102] : memref<9x16x256xf32, #tpu.memory_space<vmem>>, vector<1x16x256xf32>
    %103 = vector.shape_cast %102 : vector<1x16x256xf32> to vector<16x256xf32>
    %104 = arith.mulf %95, %103 : vector<16x256xf32>
    %c16_103 = arith.constant 16 : index
    %c0_104 = arith.constant 0 : index
    %105 = vector.load %arg8[%c16_103, %c0_104] : memref<144x512xf32, #tpu.memory_space<vmem>>, vector<16x256xf32>
    tpu.vector_store %arg8[%c16_103, %c0_104], %104 {strides = array<i32>} : memref<144x512xf32, #tpu.memory_space<vmem>>, vector<16x256xf32>,
    %c255_i32_105 = arith.constant 255 : i32
    %106 = tpu.dynamic_rotate %95 by %c255_i32_105 dim 1 : vector<16x256xf32>, i32 -> vector<16x256xf32>
    %c2_106 = arith.constant 2 : index
    %c0_107 = arith.constant 0 : index
    %c0_108 = arith.constant 0 : index
    %107 = vector.load %arg2[%c2_106, %c0_107, %c0_108] : memref<9x16x256xf32, #tpu.memory_space<vmem>>, vector<1x16x256xf32>
    %108 = vector.shape_cast %107 : vector<1x16x256xf32> to vector<16x256xf32>
    %109 = arith.mulf %106, %108 : vector<16x256xf32>
    %c32_109 = arith.constant 32 : index
    %c0_110 = arith.constant 0 : index
    %110 = vector.load %arg8[%c32_109, %c0_110] : memref<144x512xf32, #tpu.memory_space<vmem>>, vector<16x256xf32>
    tpu.vector_store %arg8[%c32_109, %c0_110], %109 {strides = array<i32>} : memref<144x512xf32, #tpu.memory_space<vmem>>, vector<16x256xf32>,
    %c1_i32_111 = arith.constant 1 : i32
    %111 = tpu.dynamic_rotate %94 by %c1_i32_111 dim 1 : vector<16x256xf32>, i32 -> vector<16x256xf32>
    %c3_112 = arith.constant 3 : index
    %c0_113 = arith.constant 0 : index
    %c0_114 = arith.constant 0 : index
    %112 = vector.load %arg2[%c3_112, %c0_113, %c0_114] : memref<9x16x256xf32, #tpu.memory_space<vmem>>, vector<1x16x256xf32>
    %113 = vector.shape_cast %112 : vector<1x16x256xf32> to vector<16x256xf32>
    %114 = arith.mulf %111, %113 : vector<16x256xf32>
    %c48_115 = arith.constant 48 : index
    %c0_116 = arith.constant 0 : index
    %115 = vector.load %arg8[%c48_115, %c0_116] : memref<144x512xf32, #tpu.memory_space<vmem>>, vector<16x256xf32>
    tpu.vector_store %arg8[%c48_115, %c0_116], %114 {strides = array<i32>} : memref<144x512xf32, #tpu.memory_space<vmem>>, vector<16x256xf32>,
    %c64_117 = arith.constant 64 : index
    %c0_118 = arith.constant 0 : index
    %116 = vector.load %arg8[%c64_117, %c0_118] : memref<144x512xf32, #tpu.memory_space<vmem>>, vector<16x256xf32>
    tpu.vector_store %arg8[%c64_117, %c0_118], %94 {strides = array<i32>} : memref<144x512xf32, #tpu.memory_space<vmem>>, vector<16x256xf32>,
    %c255_i32_119 = arith.constant 255 : i32
    %117 = tpu.dynamic_rotate %94 by %c255_i32_119 dim 1 : vector<16x256xf32>, i32 -> vector<16x256xf32>
    %c5_120 = arith.constant 5 : index
    %c0_121 = arith.constant 0 : index
    %c0_122 = arith.constant 0 : index
    %118 = vector.load %arg2[%c5_120, %c0_121, %c0_122] : memref<9x16x256xf32, #tpu.memory_space<vmem>>, vector<1x16x256xf32>
    %119 = vector.shape_cast %118 : vector<1x16x256xf32> to vector<16x256xf32>
    %120 = arith.mulf %117, %119 : vector<16x256xf32>
    %c80_123 = arith.constant 80 : index
    %c0_124 = arith.constant 0 : index
    %121 = vector.load %arg8[%c80_123, %c0_124] : memref<144x512xf32, #tpu.memory_space<vmem>>, vector<16x256xf32>
    tpu.vector_store %arg8[%c80_123, %c0_124], %120 {strides = array<i32>} : memref<144x512xf32, #tpu.memory_space<vmem>>, vector<16x256xf32>,
    %c1_i32_125 = arith.constant 1 : i32
    %122 = tpu.dynamic_rotate %96 by %c1_i32_125 dim 1 : vector<16x256xf32>, i32 -> vector<16x256xf32>
    %c6_126 = arith.constant 6 : index
    %c0_127 = arith.constant 0 : index
    %c0_128 = arith.constant 0 : index
    %123 = vector.load %arg2[%c6_126, %c0_127, %c0_128] : memref<9x16x256xf32, #tpu.memory_space<vmem>>, vector<1x16x256xf32>
    %124 = vector.shape_cast %123 : vector<1x16x256xf32> to vector<16x256xf32>
    %125 = arith.mulf %122, %124 : vector<16x256xf32>
    %c96_129 = arith.constant 96 : index
    %c0_130 = arith.constant 0 : index
    %126 = vector.load %arg8[%c96_129, %c0_130] : memref<144x512xf32, #tpu.memory_space<vmem>>, vector<16x256xf32>
    tpu.vector_store %arg8[%c96_129, %c0_130], %125 {strides = array<i32>} : memref<144x512xf32, #tpu.memory_space<vmem>>, vector<16x256xf32>,
    %c7_131 = arith.constant 7 : index
    %c0_132 = arith.constant 0 : index
    %c0_133 = arith.constant 0 : index
    %127 = vector.load %arg2[%c7_131, %c0_132, %c0_133] : memref<9x16x256xf32, #tpu.memory_space<vmem>>, vector<1x16x256xf32>
    %128 = vector.shape_cast %127 : vector<1x16x256xf32> to vector<16x256xf32>
    %129 = arith.mulf %96, %128 : vector<16x256xf32>
    %c112_134 = arith.constant 112 : index
    %c0_135 = arith.constant 0 : index
    %130 = vector.load %arg8[%c112_134, %c0_135] : memref<144x512xf32, #tpu.memory_space<vmem>>, vector<16x256xf32>
    tpu.vector_store %arg8[%c112_134, %c0_135], %129 {strides = array<i32>} : memref<144x512xf32, #tpu.memory_space<vmem>>, vector<16x256xf32>,
    %c255_i32_136 = arith.constant 255 : i32
    %131 = tpu.dynamic_rotate %96 by %c255_i32_136 dim 1 : vector<16x256xf32>, i32 -> vector<16x256xf32>
    %c8_137 = arith.constant 8 : index
    %c0_138 = arith.constant 0 : index
    %c0_139 = arith.constant 0 : index
    %132 = vector.load %arg2[%c8_137, %c0_138, %c0_139] : memref<9x16x256xf32, #tpu.memory_space<vmem>>, vector<1x16x256xf32>
    %133 = vector.shape_cast %132 : vector<1x16x256xf32> to vector<16x256xf32>
    %134 = arith.mulf %131, %133 : vector<16x256xf32>
    %c128_140 = arith.constant 128 : index
    %c0_141 = arith.constant 0 : index
    %135 = vector.load %arg8[%c128_140, %c0_141] : memref<144x512xf32, #tpu.memory_space<vmem>>, vector<16x256xf32>
    tpu.vector_store %arg8[%c128_140, %c0_141], %134 {strides = array<i32>} : memref<144x512xf32, #tpu.memory_space<vmem>>, vector<16x256xf32>,
    %136 = vector.extract_strided_slice %93 {offsets = [0, 256], sizes = [16, 256], strides = [1, 1]} : vector<16x512xf32> to vector<16x256xf32>
    %c16_i32_142 = arith.constant 16 : i32
    %137 = tpu.dynamic_rotate %136 by %c16_i32_142 dim 1 : vector<16x256xf32>, i32 -> vector<16x256xf32>
    %c240_i32_143 = arith.constant 240 : i32
    %138 = tpu.dynamic_rotate %136 by %c240_i32_143 dim 1 : vector<16x256xf32>, i32 -> vector<16x256xf32>
    %c1_i32_144 = arith.constant 1 : i32
    %139 = tpu.dynamic_rotate %137 by %c1_i32_144 dim 1 : vector<16x256xf32>, i32 -> vector<16x256xf32>
    %c0_145 = arith.constant 0 : index
    %c0_146 = arith.constant 0 : index
    %c0_147 = arith.constant 0 : index
    %140 = vector.load %arg2[%c0_145, %c0_146, %c0_147] : memref<9x16x256xf32, #tpu.memory_space<vmem>>, vector<1x16x256xf32>
    %141 = vector.shape_cast %140 : vector<1x16x256xf32> to vector<16x256xf32>
    %142 = arith.mulf %139, %141 : vector<16x256xf32>
    %c0_148 = arith.constant 0 : index
    %c256_149 = arith.constant 256 : index
    %143 = vector.load %arg8[%c0_148, %c256_149] : memref<144x512xf32, #tpu.memory_space<vmem>>, vector<16x256xf32>
    tpu.vector_store %arg8[%c0_148, %c256_149], %142 {strides = array<i32>} : memref<144x512xf32, #tpu.memory_space<vmem>>, vector<16x256xf32>,
    %c1_150 = arith.constant 1 : index
    %c0_151 = arith.constant 0 : index
    %c0_152 = arith.constant 0 : index
    %144 = vector.load %arg2[%c1_150, %c0_151, %c0_152] : memref<9x16x256xf32, #tpu.memory_space<vmem>>, vector<1x16x256xf32>
    %145 = vector.shape_cast %144 : vector<1x16x256xf32> to vector<16x256xf32>
    %146 = arith.mulf %137, %145 : vector<16x256xf32>
    %c16_153 = arith.constant 16 : index
    %c256_154 = arith.constant 256 : index
    %147 = vector.load %arg8[%c16_153, %c256_154] : memref<144x512xf32, #tpu.memory_space<vmem>>, vector<16x256xf32>
    tpu.vector_store %arg8[%c16_153, %c256_154], %146 {strides = array<i32>} : memref<144x512xf32, #tpu.memory_space<vmem>>, vector<16x256xf32>,
    %c255_i32_155 = arith.constant 255 : i32
    %148 = tpu.dynamic_rotate %137 by %c255_i32_155 dim 1 : vector<16x256xf32>, i32 -> vector<16x256xf32>
    %c2_156 = arith.constant 2 : index
    %c0_157 = arith.constant 0 : index
    %c0_158 = arith.constant 0 : index
    %149 = vector.load %arg2[%c2_156, %c0_157, %c0_158] : memref<9x16x256xf32, #tpu.memory_space<vmem>>, vector<1x16x256xf32>
    %150 = vector.shape_cast %149 : vector<1x16x256xf32> to vector<16x256xf32>
    %151 = arith.mulf %148, %150 : vector<16x256xf32>
    %c32_159 = arith.constant 32 : index
    %c256_160 = arith.constant 256 : index
    %152 = vector.load %arg8[%c32_159, %c256_160] : memref<144x512xf32, #tpu.memory_space<vmem>>, vector<16x256xf32>
    tpu.vector_store %arg8[%c32_159, %c256_160], %151 {strides = array<i32>} : memref<144x512xf32, #tpu.memory_space<vmem>>, vector<16x256xf32>,
    %c1_i32_161 = arith.constant 1 : i32
    %153 = tpu.dynamic_rotate %136 by %c1_i32_161 dim 1 : vector<16x256xf32>, i32 -> vector<16x256xf32>
    %c3_162 = arith.constant 3 : index
    %c0_163 = arith.constant 0 : index
    %c0_164 = arith.constant 0 : index
    %154 = vector.load %arg2[%c3_162, %c0_163, %c0_164] : memref<9x16x256xf32, #tpu.memory_space<vmem>>, vector<1x16x256xf32>
    %155 = vector.shape_cast %154 : vector<1x16x256xf32> to vector<16x256xf32>
    %156 = arith.mulf %153, %155 : vector<16x256xf32>
    %c48_165 = arith.constant 48 : index
    %c256_166 = arith.constant 256 : index
    %157 = vector.load %arg8[%c48_165, %c256_166] : memref<144x512xf32, #tpu.memory_space<vmem>>, vector<16x256xf32>
    tpu.vector_store %arg8[%c48_165, %c256_166], %156 {strides = array<i32>} : memref<144x512xf32, #tpu.memory_space<vmem>>, vector<16x256xf32>,
    %c64_167 = arith.constant 64 : index
    %c256_168 = arith.constant 256 : index
    %158 = vector.load %arg8[%c64_167, %c256_168] : memref<144x512xf32, #tpu.memory_space<vmem>>, vector<16x256xf32>
    tpu.vector_store %arg8[%c64_167, %c256_168], %136 {strides = array<i32>} : memref<144x512xf32, #tpu.memory_space<vmem>>, vector<16x256xf32>,
    %c255_i32_169 = arith.constant 255 : i32
    %159 = tpu.dynamic_rotate %136 by %c255_i32_169 dim 1 : vector<16x256xf32>, i32 -> vector<16x256xf32>
    %c5_170 = arith.constant 5 : index
    %c0_171 = arith.constant 0 : index
    %c0_172 = arith.constant 0 : index
    %160 = vector.load %arg2[%c5_170, %c0_171, %c0_172] : memref<9x16x256xf32, #tpu.memory_space<vmem>>, vector<1x16x256xf32>
    %161 = vector.shape_cast %160 : vector<1x16x256xf32> to vector<16x256xf32>
    %162 = arith.mulf %159, %161 : vector<16x256xf32>
    %c80_173 = arith.constant 80 : index
    %c256_174 = arith.constant 256 : index
    %163 = vector.load %arg8[%c80_173, %c256_174] : memref<144x512xf32, #tpu.memory_space<vmem>>, vector<16x256xf32>
    tpu.vector_store %arg8[%c80_173, %c256_174], %162 {strides = array<i32>} : memref<144x512xf32, #tpu.memory_space<vmem>>, vector<16x256xf32>,
    %c1_i32_175 = arith.constant 1 : i32
    %164 = tpu.dynamic_rotate %138 by %c1_i32_175 dim 1 : vector<16x256xf32>, i32 -> vector<16x256xf32>
    %c6_176 = arith.constant 6 : index
    %c0_177 = arith.constant 0 : index
    %c0_178 = arith.constant 0 : index
    %165 = vector.load %arg2[%c6_176, %c0_177, %c0_178] : memref<9x16x256xf32, #tpu.memory_space<vmem>>, vector<1x16x256xf32>
    %166 = vector.shape_cast %165 : vector<1x16x256xf32> to vector<16x256xf32>
    %167 = arith.mulf %164, %166 : vector<16x256xf32>
    %c96_179 = arith.constant 96 : index
    %c256_180 = arith.constant 256 : index
    %168 = vector.load %arg8[%c96_179, %c256_180] : memref<144x512xf32, #tpu.memory_space<vmem>>, vector<16x256xf32>
    tpu.vector_store %arg8[%c96_179, %c256_180], %167 {strides = array<i32>} : memref<144x512xf32, #tpu.memory_space<vmem>>, vector<16x256xf32>,
    %c7_181 = arith.constant 7 : index
    %c0_182 = arith.constant 0 : index
    %c0_183 = arith.constant 0 : index
    %169 = vector.load %arg2[%c7_181, %c0_182, %c0_183] : memref<9x16x256xf32, #tpu.memory_space<vmem>>, vector<1x16x256xf32>
    %170 = vector.shape_cast %169 : vector<1x16x256xf32> to vector<16x256xf32>
    %171 = arith.mulf %138, %170 : vector<16x256xf32>
    %c112_184 = arith.constant 112 : index
    %c256_185 = arith.constant 256 : index
    %172 = vector.load %arg8[%c112_184, %c256_185] : memref<144x512xf32, #tpu.memory_space<vmem>>, vector<16x256xf32>
    tpu.vector_store %arg8[%c112_184, %c256_185], %171 {strides = array<i32>} : memref<144x512xf32, #tpu.memory_space<vmem>>, vector<16x256xf32>,
    %c255_i32_186 = arith.constant 255 : i32
    %173 = tpu.dynamic_rotate %138 by %c255_i32_186 dim 1 : vector<16x256xf32>, i32 -> vector<16x256xf32>
    %c8_187 = arith.constant 8 : index
    %c0_188 = arith.constant 0 : index
    %c0_189 = arith.constant 0 : index
    %174 = vector.load %arg2[%c8_187, %c0_188, %c0_189] : memref<9x16x256xf32, #tpu.memory_space<vmem>>, vector<1x16x256xf32>
    %175 = vector.shape_cast %174 : vector<1x16x256xf32> to vector<16x256xf32>
    %176 = arith.mulf %173, %175 : vector<16x256xf32>
    %c128_190 = arith.constant 128 : index
    %c256_191 = arith.constant 256 : index
    %177 = vector.load %arg8[%c128_190, %c256_191] : memref<144x512xf32, #tpu.memory_space<vmem>>, vector<16x256xf32>
    tpu.vector_store %arg8[%c128_190, %c256_191], %176 {strides = array<i32>} : memref<144x512xf32, #tpu.memory_space<vmem>>, vector<16x256xf32>,
    %c0_192 = arith.constant 0 : index
    %c0_193 = arith.constant 0 : index
    %178 = vector.load %arg5[%c0_192, %c0_193] : memref<16x144xf32, #tpu.memory_space<vmem>>, vector<16x144xf32>
    %c0_194 = arith.constant 0 : index
    %c0_195 = arith.constant 0 : index
    %179 = vector.load %arg8[%c0_194, %c0_195] : memref<144x512xf32, #tpu.memory_space<vmem>>, vector<144x512xf32>
    %cst_196 = arith.constant dense<0.000000e+00> : vector<16x512xf32>
    %180 = tpu.matmul %178, %179, %cst_196 {dimension_numbers = #tpu.dot_dimension_numbers<[1], [0], [0], [1], [0, 0, 1, 1], [], []>} : vector<16x144xf32>, vector<144x512xf32>, vector<16x512xf32> -> vector<16x512xf32>
    %c0_197 = arith.constant 0 : index
    %c0_198 = arith.constant 0 : index
    %181 = vector.load %arg6[%c0_197, %c0_198] : memref<16x1xf32, #tpu.memory_space<vmem>>, vector<16x1xf32>
    %182 = vector.broadcast %181 : vector<16x1xf32> to vector<16x512xf32>
    %183 = arith.addf %180, %182 : vector<16x512xf32>
    %184 = vector.extract_strided_slice %183 {offsets = [0, 0], sizes = [16, 256], strides = [1, 1]} : vector<16x512xf32> to vector<16x256xf32>
    %c0_199 = arith.constant 0 : index
    %c0_200 = arith.constant 0 : index
    %c0_201 = arith.constant 0 : index
    %185 = vector.load %arg1[%c0_199, %c0_200, %c0_201] : memref<2x16x256xf32, #tpu.memory_space<vmem>>, vector<1x16x256xf32>
    %186 = vector.shape_cast %185 : vector<1x16x256xf32> to vector<16x256xf32>
    %187 = arith.addf %184, %186 : vector<16x256xf32>
    %c0_202 = arith.constant 0 : index
    %c0_203 = arith.constant 0 : index
    %c0_204 = arith.constant 0 : index
    %188 = vector.load %arg7[%c0_202, %c0_203, %c0_204] : memref<2x16x256xf32, #tpu.memory_space<vmem>>, vector<1x16x256xf32>
    %189 = vector.shape_cast %188 : vector<1x16x256xf32> to vector<16x256xf32>
    %190 = vector.shape_cast %187 : vector<16x256xf32> to vector<1x16x256xf32>
    tpu.vector_store %arg7[%c0_202, %c0_203, %c0_204], %190 {strides = array<i32>} : memref<2x16x256xf32, #tpu.memory_space<vmem>>, vector<1x16x256xf32>,
    %191 = vector.extract_strided_slice %183 {offsets = [0, 256], sizes = [16, 256], strides = [1, 1]} : vector<16x512xf32> to vector<16x256xf32>
    %c1_205 = arith.constant 1 : index
    %c0_206 = arith.constant 0 : index
    %c0_207 = arith.constant 0 : index
    %192 = vector.load %arg1[%c1_205, %c0_206, %c0_207] : memref<2x16x256xf32, #tpu.memory_space<vmem>>, vector<1x16x256xf32>
    %193 = vector.shape_cast %192 : vector<1x16x256xf32> to vector<16x256xf32>
    %194 = arith.addf %191, %193 : vector<16x256xf32>
    %c1_208 = arith.constant 1 : index
    %c0_209 = arith.constant 0 : index
    %c0_210 = arith.constant 0 : index
    %195 = vector.load %arg7[%c1_208, %c0_209, %c0_210] : memref<2x16x256xf32, #tpu.memory_space<vmem>>, vector<1x16x256xf32>
    %196 = vector.shape_cast %195 : vector<1x16x256xf32> to vector<16x256xf32>
    %197 = vector.shape_cast %194 : vector<16x256xf32> to vector<1x16x256xf32>
    tpu.vector_store %arg7[%c1_208, %c0_209, %c0_210], %197 {strides = array<i32>} : memref<2x16x256xf32, #tpu.memory_space<vmem>>, vector<1x16x256xf32>,
    return
  }
  func.func @transform_0(%arg0: i32) -> (i32, i32, i32) {
    %c0_i32 = arith.constant 0 : i32
    %c0_i32_0 = arith.constant 0 : i32
    %c0_i32_1 = arith.constant 0 : i32
    return %arg0, %c0_i32, %c0_i32_0 : i32, i32, i32
  }
  func.func @transform_1(%arg0: i32) -> (i32, i32, i32) {
    %c0_i32 = arith.constant 0 : i32
    %c0_i32_0 = arith.constant 0 : i32
    %c0_i32_1 = arith.constant 0 : i32
    %c0_i32_2 = arith.constant 0 : i32
    return %c0_i32, %c0_i32_0, %c0_i32_1 : i32, i32, i32
  }
  func.func @transform_2(%arg0: i32) -> (i32, i32) {
    %c0_i32 = arith.constant 0 : i32
    %c0_i32_0 = arith.constant 0 : i32
    %c0_i32_1 = arith.constant 0 : i32
    return %c0_i32, %c0_i32_0 : i32, i32
  }
  func.func @transform_3(%arg0: i32) -> (i32, i32) {
    %c0_i32 = arith.constant 0 : i32
    %c0_i32_0 = arith.constant 0 : i32
    %c0_i32_1 = arith.constant 0 : i32
    return %c0_i32, %c0_i32_0 : i32, i32
  }
  func.func @transform_4(%arg0: i32) -> (i32, i32) {
    %c0_i32 = arith.constant 0 : i32
    %c0_i32_0 = arith.constant 0 : i32
    %c0_i32_1 = arith.constant 0 : i32
    return %c0_i32, %c0_i32_0 : i32, i32
  }
  func.func @transform_5(%arg0: i32) -> (i32, i32) {
    %c0_i32 = arith.constant 0 : i32
    %c0_i32_0 = arith.constant 0 : i32
    %c0_i32_1 = arith.constant 0 : i32
    return %c0_i32, %c0_i32_0 : i32, i32
  }
  func.func @transform_6(%arg0: i32) -> (i32, i32, i32) {
    %c0_i32 = arith.constant 0 : i32
    %c0_i32_0 = arith.constant 0 : i32
    %c0_i32_1 = arith.constant 0 : i32
    return %arg0, %c0_i32, %c0_i32_0 : i32, i32, i32
  }
}

</mosaic_0001>

<llo_original>
// kernel: tpu_custom_call.1
$region0: #{tpu_custom_call.1}
  #allocation0 [shape = 'u32[]', space=smem, size = 0x4, offset = 0x4, fixed_abs, tag = 'smem constant byte address 0x4 - core index']
  #allocation1 [shape = 'u32[144,128]{1,0:T(1,128)}', space=vmem, size = 0x12000, scoped, tag = 'internal scratch']
  #allocation2 [shape = 'f32[144,512]{1,0:T(8,128)}', space=vmem, size = 0x48000, scoped, tag = 'scratch operand']
  %s0 = inlined_call_operand.hbm [shape: f32[2,16,256], index: 0, kind: input, shape index: {}]
  %s1 = inlined_call_operand.hbm [shape: f32[9,16,256], index: 1, kind: input, shape index: {}]
  %s2 = inlined_call_operand.vmem [shape: f32[16,144], index: 2, kind: input, shape index: {}]
  %s3 = inlined_call_operand.vmem [shape: f32[16,1], index: 3, kind: input, shape index: {}]
  %s4 = inlined_call_operand.hbm [shape: f32[16,144], index: 4, kind: input, shape index: {}]
  %s5 = inlined_call_operand.vmem [shape: f32[16,1], index: 5, kind: input, shape index: {}]
  %s6 = inlined_call_operand.hbm [shape: f32[2,16,256], index: 6, kind: output, shape index: {}]
  %s7 = sld [smem:[#allocation0]]
  $region46: #{tpu_custom_call.1} parent=0
    _
  %s9 = ssub.s32 1, %s7
  %s10 = scalar_select 0, %s9, %s7
  $region1: #{tpu_custom_call.1} parent=0
    #allocation3 [shape = 'u8[32768]{0}', space=vmem, size = 0x8000, scoped, tag = 'input window, operand 0, single buffered']
    #allocation4 [shape = 's32[1]{0}', space=sflag, size = 0x4, scoped, tag = 'scoped memory for tpu_custom_call.1']
    #allocation5 [shape = 's32[1]{0}', space=sflag, size = 0x4, scoped, tag = 'scoped memory for tpu_custom_call.1']
    #allocation6 [shape = 'u8[147456]{0}', space=vmem, size = 0x24000, scoped, tag = 'input window, operand 1, single buffered']
    #allocation7 [shape = 's32[1]{0}', space=sflag, size = 0x4, scoped, tag = 'scoped memory for tpu_custom_call.1']
    #allocation8 [shape = 'u8[16384]{0}', space=vmem, size = 0x4000, scoped, tag = 'input window, operand 4, single buffered']
    #allocation9 [shape = 'u8[32768]{0}', space=vmem, size = 0x8000, scoped, tag = 'output window, operand 0, single buffered']
    %11 = vsyncpa [#allocation4], 0
    %12 = vsyncpa [#allocation7], 0
    %13 = vsyncpa [#allocation5], 0
    // Predicated region
    $region2: #{tpu_custom_call.1} parent=1 // pred_check
      _
    $region3: #{tpu_custom_call.1} parent=1 // pred_check_branch
      %15 = sbr.rel (0) target = $region5
    $region4: #{tpu_custom_call.1} parent=1 // pred_region
      %s17 = ssub.s32 1024, 1024
      %18 = vsyncadd [#allocation4], %s17
      %s19 = sshll.u32 [#allocation3], 4
      %s20 = int_to_ptr.vmem [resolvable:$true] %s19
      %25 = dma.hbm_to_vmem [thread:$0]  %s0, 1024, %s20, [#allocation4], 256, 256, 16
    $region5: #{tpu_custom_call.1} parent=1 // pred_fallthru
      _
    // Predicated region
    $region6: #{tpu_custom_call.1} parent=1 // pred_check
      _
    $region7: #{tpu_custom_call.1} parent=1 // pred_check_branch
      %27 = sbr.rel (0) target = $region9
    $region8: #{tpu_custom_call.1} parent=1 // pred_region
      %s29 = ssub.s32 4608, 4608
      %30 = vsyncadd [#allocation7], %s29
      %s31 = sshll.u32 [#allocation6], 4
      %s32 = int_to_ptr.vmem [resolvable:$true] %s31
      %37 = dma.hbm_to_vmem [thread:$0]  %s1, 4608, %s32, [#allocation7], 256, 256, 16
    $region9: #{tpu_custom_call.1} parent=1 // pred_fallthru
      _
    // Predicated region
    $region10: #{tpu_custom_call.1} parent=1 // pred_check
      _
    $region11: #{tpu_custom_call.1} parent=1 // pred_check_branch
      %39 = sbr.rel (0) target = $region13
    $region12: #{tpu_custom_call.1} parent=1 // pred_region
      _
    $region13: #{tpu_custom_call.1} parent=1 // pred_fallthru
      _
    // Predicated region
    $region14: #{tpu_custom_call.1} parent=1 // pred_check
      _
    $region15: #{tpu_custom_call.1} parent=1 // pred_check_branch
      %41 = sbr.rel (0) target = $region17
    $region16: #{tpu_custom_call.1} parent=1 // pred_region
      _
    $region17: #{tpu_custom_call.1} parent=1 // pred_fallthru
      _
    // Predicated region
    $region18: #{tpu_custom_call.1} parent=1 // pred_check
      _
    $region19: #{tpu_custom_call.1} parent=1 // pred_check_branch
      %43 = sbr.rel (0) target = $region21
    $region20: #{tpu_custom_call.1} parent=1 // pred_region
      %s45 = ssub.s32 512, 512
      %46 = vsyncadd [#allocation7], %s45
      %s47 = sshll.u32 [#allocation8], 4
      %s48 = int_to_ptr.vmem [resolvable:$true] %s47
      %53 = dma.hbm_to_vmem [thread:$0]  %s4, 512, %s48, [#allocation7], 256, 256, 16
    $region21: #{tpu_custom_call.1} parent=1 // pred_fallthru
      _
    // Predicated region
    $region22: #{tpu_custom_call.1} parent=1 // pred_check
      _
    $region23: #{tpu_custom_call.1} parent=1 // pred_check_branch
      %55 = sbr.rel (0) target = $region25
    $region24: #{tpu_custom_call.1} parent=1 // pred_region
      _
    $region25: #{tpu_custom_call.1} parent=1 // pred_fallthru
      _
    // Predicated region
    $region26: #{tpu_custom_call.1} parent=1 // pred_check
      _
    $region27: #{tpu_custom_call.1} parent=1 // pred_check_branch
      %57 = sbr.rel (0) target = $region29
    $region28: #{tpu_custom_call.1} parent=1 // pred_region
      %58 = dma.done [#allocation4], 1024
    $region29: #{tpu_custom_call.1} parent=1 // pred_fallthru
      _
    // Predicated region
    $region30: #{tpu_custom_call.1} parent=1 // pred_check
      _
    $region31: #{tpu_custom_call.1} parent=1 // pred_check_branch
      %60 = sbr.rel (0) target = $region33
    $region32: #{tpu_custom_call.1} parent=1 // pred_region
      %61 = dma.done [#allocation7], 4608
    $region33: #{tpu_custom_call.1} parent=1 // pred_fallthru
      _
    // Predicated region
    $region34: #{tpu_custom_call.1} parent=1 // pred_check
      _
    $region35: #{tpu_custom_call.1} parent=1 // pred_check_branch
      %63 = sbr.rel (0) target = $region37
    $region36: #{tpu_custom_call.1} parent=1 // pred_region
      %64 = dma.done [#allocation7], 512
    $region37: #{tpu_custom_call.1} parent=1 // pred_fallthru
      _
    %v65 = vld [vmem:[#allocation3] sm:$0xff]
    %v66 = vld [vmem:[#allocation3 + $0x8] sm:$0xff]
    %v67 = vld [vmem:[#allocation3 + $0x10] sm:$0xff]
    %v68 = vld [vmem:[#allocation3 + $0x18] sm:$0xff]
    %69 = vrot.lane.b32.xlu0 %v65, 16
    %v70 = vpop.permute.xlu0 %69
    %71 = vrot.lane.b32.xlu0 %v67, 16
    %v72 = vpop.permute.xlu0 %71
    %73 = vrot.lane.b32.xlu0 %v66, 16
    %v74 = vpop.permute.xlu0 %73
    %75 = vrot.lane.b32.xlu0 %v68, 16
    %v76 = vpop.permute.xlu0 %75
    %v77 = vlaneseq
    %v78 = vand.u32 %v77, 127
    %vm79 = vcmp.lt.s32.totalorder %v78, 16
    %v80 = vsel %vm79, %v70, %v74
    %v81 = vsel %vm79, %v72, %v76
    %v82 = vsel %vm79, %v74, %v70
    %v83 = vsel %vm79, %v76, %v72
    %84 = vrot.lane.b32.xlu0 %v65, 112
    %v85 = vpop.permute.xlu0 %84
    %86 = vrot.lane.b32.xlu0 %v67, 112
    %v87 = vpop.permute.xlu0 %86
    %88 = vrot.lane.b32.xlu0 %v66, 112
    %v89 = vpop.permute.xlu0 %88
    %90 = vrot.lane.b32.xlu0 %v68, 112
    %v91 = vpop.permute.xlu0 %90
    %vm92 = vcmp.lt.s32.totalorder %v78, 112
    %v93 = vsel %vm92, %v85, %v89
    %v94 = vsel %vm92, %v87, %v91
    %v95 = vsel %vm92, %v89, %v85
    %v96 = vsel %vm92, %v91, %v87
    %97 = vrot.lane.b32.xlu0 %v82, 1
    %v98 = vpop.permute.xlu0 %97
    %99 = vrot.lane.b32.xlu0 %v83, 1
    %v100 = vpop.permute.xlu0 %99
    %101 = vrot.lane.b32.xlu0 %v80, 1
    %v102 = vpop.permute.xlu0 %101
    %103 = vrot.lane.b32.xlu0 %v81, 1
    %v104 = vpop.permute.xlu0 %103
    %vm105 = vcmp.lt.s32.totalorder %v78, 1
    %v106 = vsel %vm105, %v98, %v102
    %v107 = vsel %vm105, %v100, %v104
    %v108 = vsel %vm105, %v102, %v98
    %v109 = vsel %vm105, %v104, %v100
    %v110 = vld [vmem:[#allocation6] sm:$0xff]
    %v111 = vld [vmem:[#allocation6 + $0x8] sm:$0xff]
    %v112 = vld [vmem:[#allocation6 + $0x10] sm:$0xff]
    %v113 = vld [vmem:[#allocation6 + $0x18] sm:$0xff]
    %v114 = vmul.f32 %v108, %v110
    %v115 = vmul.f32 %v106, %v111
    %v116 = vmul.f32 %v109, %v112
    %v117 = vmul.f32 %v107, %v113
    %118 = vst [vmem:[#allocation2] sm:$0xff] %v114
    %119 = vst [vmem:[#allocation2 + $0x8] sm:$0xff] %v115
    %120 = vst [vmem:[#allocation2 + $0x20] sm:$0xff] %v116
    %121 = vst [vmem:[#allocation2 + $0x28] sm:$0xff] %v117
    %s122 = scalar_lea.vmem [#allocation6], 32
    %v123 = vld [vmem:[%s122] sm:$0xff]
    %v124 = vld [vmem:[%s122 + $0x8] sm:$0xff]
    %v125 = vld [vmem:[%s122 + $0x10] sm:$0xff]
    %v126 = vld [vmem:[%s122 + $0x18] sm:$0xff]
    %v127 = vmul.f32 %v82, %v123
    %v128 = vmul.f32 %v80, %v124
    %v129 = vmul.f32 %v83, %v125
    %v130 = vmul.f32 %v81, %v126
    %131 = vst [vmem:[#allocation2 + $0x40] sm:$0xff] %v127
    %132 = vst [vmem:[#allocation2 + $0x48] sm:$0xff] %v128
    %133 = vst [vmem:[#allocation2 + $0x60] sm:$0xff] %v129
    %134 = vst [vmem:[#allocation2 + $0x68] sm:$0xff] %v130
    %135 = vrot.lane.b32.xlu0 %v82, 127
    %v136 = vpop.permute.xlu0 %135
    %137 = vrot.lane.b32.xlu0 %v83, 127
    %v138 = vpop.permute.xlu0 %137
    %139 = vrot.lane.b32.xlu0 %v80, 127
    %v140 = vpop.permute.xlu0 %139
    %141 = vrot.lane.b32.xlu0 %v81, 127
    %v142 = vpop.permute.xlu0 %141
    %vm143 = vcmp.lt.s32.totalorder %v78, 127
    %v144 = vsel %vm143, %v136, %v140
    %v145 = vsel %vm143, %v138, %v142
    %v146 = vsel %vm143, %v140, %v136
    %v147 = vsel %vm143, %v142, %v138
    %s148 = scalar_lea.vmem [#allocation6], 64
    %v149 = vld [vmem:[%s148] sm:$0xff]
    %v150 = vld [vmem:[%s148 + $0x8] sm:$0xff]
    %v151 = vld [vmem:[%s148 + $0x10] sm:$0xff]
    %v152 = vld [vmem:[%s148 + $0x18] sm:$0xff]
    %v153 = vmul.f32 %v144, %v149
    %v154 = vmul.f32 %v146, %v150
    %v155 = vmul.f32 %v145, %v151
    %v156 = vmul.f32 %v147, %v152
    %157 = vst [vmem:[#allocation2 + $0x80] sm:$0xff] %v153
    %158 = vst [vmem:[#allocation2 + $0x88] sm:$0xff] %v154
    %159 = vst [vmem:[#allocation2 + $0xa0] sm:$0xff] %v155
    %160 = vst [vmem:[#allocation2 + $0xa8] sm:$0xff] %v156
    %161 = vrot.lane.b32.xlu0 %v65, 1
    %v162 = vpop.permute.xlu0 %161
    %163 = vrot.lane.b32.xlu0 %v67, 1
    %v164 = vpop.permute.xlu0 %163
    %165 = vrot.lane.b32.xlu0 %v66, 1
    %v166 = vpop.permute.xlu0 %165
    %167 = vrot.lane.b32.xlu0 %v68, 1
    %v168 = vpop.permute.xlu0 %167
    %v169 = vsel %vm105, %v162, %v166
    %v170 = vsel %vm105, %v164, %v168
    %v171 = vsel %vm105, %v166, %v162
    %v172 = vsel %vm105, %v168, %v164
    %s173 = scalar_lea.vmem [#allocation6], 96
    %v174 = vld [vmem:[%s173] sm:$0xff]
    %v175 = vld [vmem:[%s173 + $0x8] sm:$0xff]
    %v176 = vld [vmem:[%s173 + $0x10] sm:$0xff]
    %v177 = vld [vmem:[%s173 + $0x18] sm:$0xff]
    %v178 = vmul.f32 %v171, %v174
    %v179 = vmul.f32 %v169, %v175
    %v180 = vmul.f32 %v172, %v176
    %v181 = vmul.f32 %v170, %v177
    %182 = vst [vmem:[#allocation2 + $0xc0] sm:$0xff] %v178
    %183 = vst [vmem:[#allocation2 + $0xc8] sm:$0xff] %v179
    %184 = vst [vmem:[#allocation2 + $0xe0] sm:$0xff] %v180
    %185 = vst [vmem:[#allocation2 + $0xe8] sm:$0xff] %v181
    %186 = vst [vmem:[#allocation2 + $0x100] sm:$0xff] %v65
    %187 = vst [vmem:[#allocation2 + $0x108] sm:$0xff] %v66
    %188 = vst [vmem:[#allocation2 + $0x120] sm:$0xff] %v67
    %189 = vst [vmem:[#allocation2 + $0x128] sm:$0xff] %v68
    %190 = vrot.lane.b32.xlu0 %v65, 127
    %v191 = vpop.permute.xlu0 %190
    %192 = vrot.lane.b32.xlu0 %v67, 127
    %v193 = vpop.permute.xlu0 %192
    %194 = vrot.lane.b32.xlu0 %v66, 127
    %v195 = vpop.permute.xlu0 %194
    %196 = vrot.lane.b32.xlu0 %v68, 127
    %v197 = vpop.permute.xlu0 %196
    %v198 = vsel %vm143, %v191, %v195
    %v199 = vsel %vm143, %v193, %v197
    %v200 = vsel %vm143, %v195, %v191
    %v201 = vsel %vm143, %v197, %v193
    %s202 = scalar_lea.vmem [#allocation6], 160
    %v203 = vld [vmem:[%s202] sm:$0xff]
    %v204 = vld [vmem:[%s202 + $0x8] sm:$0xff]
    %v205 = vld [vmem:[%s202 + $0x10] sm:$0xff]
    %v206 = vld [vmem:[%s202 + $0x18] sm:$0xff]
    %v207 = vmul.f32 %v198, %v203
    %v208 = vmul.f32 %v200, %v204
    %v209 = vmul.f32 %v199, %v205
    %v210 = vmul.f32 %v201, %v206
    %211 = vst [vmem:[#allocation2 + $0x140] sm:$0xff] %v207
    %212 = vst [vmem:[#allocation2 + $0x148] sm:$0xff] %v208
    %213 = vst [vmem:[#allocation2 + $0x160] sm:$0xff] %v209
    %214 = vst [vmem:[#allocation2 + $0x168] sm:$0xff] %v210
    %215 = vrot.lane.b32.xlu0 %v93, 1
    %v216 = vpop.permute.xlu0 %215
    %217 = vrot.lane.b32.xlu0 %v94, 1
    %v218 = vpop.permute.xlu0 %217
    %219 = vrot.lane.b32.xlu0 %v95, 1
    %v220 = vpop.permute.xlu0 %219
    %221 = vrot.lane.b32.xlu0 %v96, 1
    %v222 = vpop.permute.xlu0 %221
    %v223 = vsel %vm105, %v216, %v220
    %v224 = vsel %vm105, %v218, %v222
    %v225 = vsel %vm105, %v220, %v216
    %v226 = vsel %vm105, %v222, %v218
    %s227 = scalar_lea.vmem [#allocation6], 192
    %v228 = vld [vmem:[%s227] sm:$0xff]
    %v229 = vld [vmem:[%s227 + $0x8] sm:$0xff]
    %v230 = vld [vmem:[%s227 + $0x10] sm:$0xff]
    %v231 = vld [vmem:[%s227 + $0x18] sm:$0xff]
    %v232 = vmul.f32 %v225, %v228
    %v233 = vmul.f32 %v223, %v229
    %v234 = vmul.f32 %v226, %v230
    %v235 = vmul.f32 %v224, %v231
    %236 = vst [vmem:[#allocation2 + $0x180] sm:$0xff] %v232
    %237 = vst [vmem:[#allocation2 + $0x188] sm:$0xff] %v233
    %238 = vst [vmem:[#allocation2 + $0x1a0] sm:$0xff] %v234
    %239 = vst [vmem:[#allocation2 + $0x1a8] sm:$0xff] %v235
    %s240 = scalar_lea.vmem [#allocation6], 224
    %v241 = vld [vmem:[%s240] sm:$0xff]
    %v242 = vld [vmem:[%s240 + $0x8] sm:$0xff]
    %v243 = vld [vmem:[%s240 + $0x10] sm:$0xff]
    %v244 = vld [vmem:[%s240 + $0x18] sm:$0xff]
    %v245 = vmul.f32 %v93, %v241
    %v246 = vmul.f32 %v95, %v242
    %v247 = vmul.f32 %v94, %v243
    %v248 = vmul.f32 %v96, %v244
    %249 = vst [vmem:[#allocation2 + $0x1c0] sm:$0xff] %v245
    %250 = vst [vmem:[#allocation2 + $0x1c8] sm:$0xff] %v246
    %251 = vst [vmem:[#allocation2 + $0x1e0] sm:$0xff] %v247
    %252 = vst [vmem:[#allocation2 + $0x1e8] sm:$0xff] %v248
    %253 = vrot.lane.b32.xlu0 %v93, 127
    %v254 = vpop.permute.xlu0 %253
    %255 = vrot.lane.b32.xlu0 %v94, 127
    %v256 = vpop.permute.xlu0 %255
    %257 = vrot.lane.b32.xlu0 %v95, 127
    %v258 = vpop.permute.xlu0 %257
    %259 = vrot.lane.b32.xlu0 %v96, 127
    %v260 = vpop.permute.xlu0 %259
    %v261 = vsel %vm143, %v254, %v258
    %v262 = vsel %vm143, %v256, %v260
    %v263 = vsel %vm143, %v258, %v254
    %v264 = vsel %vm143, %v260, %v256
    %s265 = scalar_lea.vmem [#allocation6], 256
    %v266 = vld [vmem:[%s265] sm:$0xff]
    %v267 = vld [vmem:[%s265 + $0x8] sm:$0xff]
    %v268 = vld [vmem:[%s265 + $0x10] sm:$0xff]
    %v269 = vld [vmem:[%s265 + $0x18] sm:$0xff]
    %v270 = vmul.f32 %v261, %v266
    %v271 = vmul.f32 %v263, %v267
    %v272 = vmul.f32 %v262, %v268
    %v273 = vmul.f32 %v264, %v269
    %274 = vst [vmem:[#allocation2 + $0x200] sm:$0xff] %v270
    %275 = vst [vmem:[#allocation2 + $0x208] sm:$0xff] %v271
    %276 = vst [vmem:[#allocation2 + $0x220] sm:$0xff] %v272
    %277 = vst [vmem:[#allocation2 + $0x228] sm:$0xff] %v273
    %s278 = scalar_lea.vmem [#allocation3], 32
    %v279 = vld [vmem:[%s278] sm:$0xff]
    %v280 = vld [vmem:[%s278 + $0x8] sm:$0xff]
    %v281 = vld [vmem:[%s278 + $0x10] sm:$0xff]
    %v282 = vld [vmem:[%s278 + $0x18] sm:$0xff]
    %283 = vrot.lane.b32.xlu0 %v279, 16
    %v284 = vpop.permute.xlu0 %283
    %285 = vrot.lane.b32.xlu0 %v281, 16
    %v286 = vpop.permute.xlu0 %285
    %287 = vrot.lane.b32.xlu0 %v280, 16
    %v288 = vpop.permute.xlu0 %287
    %289 = vrot.lane.b32.xlu0 %v282, 16
    %v290 = vpop.permute.xlu0 %289
    %v291 = vsel %vm79, %v284, %v288
    %v292 = vsel %vm79, %v286, %v290
    %v293 = vsel %vm79, %v288, %v284
    %v294 = vsel %vm79, %v290, %v286
    %295 = vrot.lane.b32.xlu0 %v279, 112
    %v296 = vpop.permute.xlu0 %295
    %297 = vrot.lane.b32.xlu0 %v281, 112
    %v298 = vpop.permute.xlu0 %297
    %299 = vrot.lane.b32.xlu0 %v280, 112
    %v300 = vpop.permute.xlu0 %299
    %301 = vrot.lane.b32.xlu0 %v282, 112
    %v302 = vpop.permute.xlu0 %301
    %v303 = vsel %vm92, %v296, %v300
    %v304 = vsel %vm92, %v298, %v302
    %v305 = vsel %vm92, %v300, %v296
    %v306 = vsel %vm92, %v302, %v298
    %307 = vrot.lane.b32.xlu0 %v293, 1
    %v308 = vpop.permute.xlu0 %307
    %309 = vrot.lane.b32.xlu0 %v294, 1
    %v310 = vpop.permute.xlu0 %309
    %311 = vrot.lane.b32.xlu0 %v291, 1
    %v312 = vpop.permute.xlu0 %311
    %313 = vrot.lane.b32.xlu0 %v292, 1
    %v314 = vpop.permute.xlu0 %313
    %v315 = vsel %vm105, %v308, %v312
    %v316 = vsel %vm105, %v310, %v314
    %v317 = vsel %vm105, %v312, %v308
    %v318 = vsel %vm105, %v314, %v310
    %v319 = vld [vmem:[#allocation6] sm:$0xff]
    %v320 = vld [vmem:[#allocation6 + $0x8] sm:$0xff]
    %v321 = vld [vmem:[#allocation6 + $0x10] sm:$0xff]
    %v322 = vld [vmem:[#allocation6 + $0x18] sm:$0xff]
    %v323 = vmul.f32 %v317, %v319
    %v324 = vmul.f32 %v315, %v320
    %v325 = vmul.f32 %v318, %v321
    %v326 = vmul.f32 %v316, %v322
    %327 = vst [vmem:[#allocation2 + $0x10] sm:$0xff] %v323
    %328 = vst [vmem:[#allocation2 + $0x18] sm:$0xff] %v324
    %329 = vst [vmem:[#allocation2 + $0x30] sm:$0xff] %v325
    %330 = vst [vmem:[#allocation2 + $0x38] sm:$0xff] %v326
    %v331 = vld [vmem:[%s122] sm:$0xff]
    %v332 = vld [vmem:[%s122 + $0x8] sm:$0xff]
    %v333 = vld [vmem:[%s122 + $0x10] sm:$0xff]
    %v334 = vld [vmem:[%s122 + $0x18] sm:$0xff]
    %v335 = vmul.f32 %v293, %v331
    %v336 = vmul.f32 %v291, %v332
    %v337 = vmul.f32 %v294, %v333
    %v338 = vmul.f32 %v292, %v334
    %339 = vst [vmem:[#allocation2 + $0x50] sm:$0xff] %v335
    %340 = vst [vmem:[#allocation2 + $0x58] sm:$0xff] %v336
    %341 = vst [vmem:[#allocation2 + $0x70] sm:$0xff] %v337
    %342 = vst [vmem:[#allocation2 + $0x78] sm:$0xff] %v338
    %343 = vrot.lane.b32.xlu0 %v293, 127
    %v344 = vpop.permute.xlu0 %343
    %345 = vrot.lane.b32.xlu0 %v294, 127
    %v346 = vpop.permute.xlu0 %345
    %347 = vrot.lane.b32.xlu0 %v291, 127
    %v348 = vpop.permute.xlu0 %347
    %349 = vrot.lane.b32.xlu0 %v292, 127
    %v350 = vpop.permute.xlu0 %349
    %v351 = vsel %vm143, %v344, %v348
    %v352 = vsel %vm143, %v346, %v350
    %v353 = vsel %vm143, %v348, %v344
    %v354 = vsel %vm143, %v350, %v346
    %v355 = vld [vmem:[%s148] sm:$0xff]
    %v356 = vld [vmem:[%s148 + $0x8] sm:$0xff]
    %v357 = vld [vmem:[%s148 + $0x10] sm:$0xff]
    %v358 = vld [vmem:[%s148 + $0x18] sm:$0xff]
    %v359 = vmul.f32 %v351, %v355
    %v360 = vmul.f32 %v353, %v356
    %v361 = vmul.f32 %v352, %v357
    %v362 = vmul.f32 %v354, %v358
    %363 = vst [vmem:[#allocation2 + $0x90] sm:$0xff] %v359
    %364 = vst [vmem:[#allocation2 + $0x98] sm:$0xff] %v360
    %365 = vst [vmem:[#allocation2 + $0xb0] sm:$0xff] %v361
    %366 = vst [vmem:[#allocation2 + $0xb8] sm:$0xff] %v362
    %367 = vrot.lane.b32.xlu0 %v279, 1
    %v368 = vpop.permute.xlu0 %367
    %369 = vrot.lane.b32.xlu0 %v281, 1
    %v370 = vpop.permute.xlu0 %369
    %371 = vrot.lane.b32.xlu0 %v280, 1
    %v372 = vpop.permute.xlu0 %371
    %373 = vrot.lane.b32.xlu0 %v282, 1
    %v374 = vpop.permute.xlu0 %373
    %v375 = vsel %vm105, %v368, %v372
    %v376 = vsel %vm105, %v370, %v374
    %v377 = vsel %vm105, %v372, %v368
    %v378 = vsel %vm105, %v374, %v370
    %v379 = vld [vmem:[%s173] sm:$0xff]
    %v380 = vld [vmem:[%s173 + $0x8] sm:$0xff]
    %v381 = vld [vmem:[%s173 + $0x10] sm:$0xff]
    %v382 = vld [vmem:[%s173 + $0x18] sm:$0xff]
    %v383 = vmul.f32 %v377, %v379
    %v384 = vmul.f32 %v375, %v380
    %v385 = vmul.f32 %v378, %v381
    %v386 = vmul.f32 %v376, %v382
    %387 = vst [vmem:[#allocation2 + $0xd0] sm:$0xff] %v383
    %388 = vst [vmem:[#allocation2 + $0xd8] sm:$0xff] %v384
    %389 = vst [vmem:[#allocation2 + $0xf0] sm:$0xff] %v385
    %390 = vst [vmem:[#allocation2 + $0xf8] sm:$0xff] %v386
    %391 = vst [vmem:[#allocation2 + $0x110] sm:$0xff] %v279
    %392 = vst [vmem:[#allocation2 + $0x118] sm:$0xff] %v280
    %393 = vst [vmem:[#allocation2 + $0x130] sm:$0xff] %v281
    %394 = vst [vmem:[#allocation2 + $0x138] sm:$0xff] %v282
    %395 = vrot.lane.b32.xlu0 %v279, 127
    %v396 = vpop.permute.xlu0 %395
    %397 = vrot.lane.b32.xlu0 %v281, 127
    %v398 = vpop.permute.xlu0 %397
    %399 = vrot.lane.b32.xlu0 %v280, 127
    %v400 = vpop.permute.xlu0 %399
    %401 = vrot.lane.b32.xlu0 %v282, 127
    %v402 = vpop.permute.xlu0 %401
    %v403 = vsel %vm143, %v396, %v400
    %v404 = vsel %vm143, %v398, %v402
    %v405 = vsel %vm143, %v400, %v396
    %v406 = vsel %vm143, %v402, %v398
    %v407 = vld [vmem:[%s202] sm:$0xff]
    %v408 = vld [vmem:[%s202 + $0x8] sm:$0xff]
    %v409 = vld [vmem:[%s202 + $0x10] sm:$0xff]
    %v410 = vld [vmem:[%s202 + $0x18] sm:$0xff]
    %v411 = vmul.f32 %v403, %v407
    %v412 = vmul.f32 %v405, %v408
    %v413 = vmul.f32 %v404, %v409
    %v414 = vmul.f32 %v406, %v410
    %415 = vst [vmem:[#allocation2 + $0x150] sm:$0xff] %v411
    %416 = vst [vmem:[#allocation2 + $0x158] sm:$0xff] %v412
    %417 = vst [vmem:[#allocation2 + $0x170] sm:$0xff] %v413
    %418 = vst [vmem:[#allocation2 + $0x178] sm:$0xff] %v414
    %419 = vrot.lane.b32.xlu0 %v303, 1
    %v420 = vpop.permute.xlu0 %419
    %421 = vrot.lane.b32.xlu0 %v304, 1
    %v422 = vpop.permute.xlu0 %421
    %423 = vrot.lane.b32.xlu0 %v305, 1
    %v424 = vpop.permute.xlu0 %423
    %425 = vrot.lane.b32.xlu0 %v306, 1
    %v426 = vpop.permute.xlu0 %425
    %v427 = vsel %vm105, %v420, %v424
    %v428 = vsel %vm105, %v422, %v426
    %v429 = vsel %vm105, %v424, %v420
    %v430 = vsel %vm105, %v426, %v422
    %v431 = vld [vmem:[%s227] sm:$0xff]
    %v432 = vld [vmem:[%s227 + $0x8] sm:$0xff]
    %v433 = vld [vmem:[%s227 + $0x10] sm:$0xff]
    %v434 = vld [vmem:[%s227 + $0x18] sm:$0xff]
    %v435 = vmul.f32 %v429, %v431
    %v436 = vmul.f32 %v427, %v432
    %v437 = vmul.f32 %v430, %v433
    %v438 = vmul.f32 %v428, %v434
    %439 = vst [vmem:[#allocation2 + $0x190] sm:$0xff] %v435
    %440 = vst [vmem:[#allocation2 + $0x198] sm:$0xff] %v436
    %441 = vst [vmem:[#allocation2 + $0x1b0] sm:$0xff] %v437
    %442 = vst [vmem:[#allocation2 + $0x1b8] sm:$0xff] %v438
    %v443 = vld [vmem:[%s240] sm:$0xff]
    %v444 = vld [vmem:[%s240 + $0x8] sm:$0xff]
    %v445 = vld [vmem:[%s240 + $0x10] sm:$0xff]
    %v446 = vld [vmem:[%s240 + $0x18] sm:$0xff]
    %v447 = vmul.f32 %v303, %v443
    %v448 = vmul.f32 %v305, %v444
    %v449 = vmul.f32 %v304, %v445
    %v450 = vmul.f32 %v306, %v446
    %451 = vst [vmem:[#allocation2 + $0x1d0] sm:$0xff] %v447
    %452 = vst [vmem:[#allocation2 + $0x1d8] sm:$0xff] %v448
    %453 = vst [vmem:[#allocation2 + $0x1f0] sm:$0xff] %v449
    %454 = vst [vmem:[#allocation2 + $0x1f8] sm:$0xff] %v450
    %455 = vrot.lane.b32.xlu0 %v303, 127
    %v456 = vpop.permute.xlu0 %455
    %457 = vrot.lane.b32.xlu0 %v304, 127
    %v458 = vpop.permute.xlu0 %457
    %459 = vrot.lane.b32.xlu0 %v305, 127
    %v460 = vpop.permute.xlu0 %459
    %461 = vrot.lane.b32.xlu0 %v306, 127
    %v462 = vpop.permute.xlu0 %461
    %v463 = vsel %vm143, %v456, %v460
    %v464 = vsel %vm143, %v458, %v462
    %v465 = vsel %vm143, %v460, %v456
    %v466 = vsel %vm143, %v462, %v458
    %v467 = vld [vmem:[%s265] sm:$0xff]
    %v468 = vld [vmem:[%s265 + $0x8] sm:$0xff]
    %v469 = vld [vmem:[%s265 + $0x10] sm:$0xff]
    %v470 = vld [vmem:[%s265 + $0x18] sm:$0xff]
    %v471 = vmul.f32 %v463, %v467
    %v472 = vmul.f32 %v465, %v468
    %v473 = vmul.f32 %v464, %v469
    %v474 = vmul.f32 %v466, %v470
    %475 = vst [vmem:[#allocation2 + $0x210] sm:$0xff] %v471
    %476 = vst [vmem:[#allocation2 + $0x218] sm:$0xff] %v472
    %477 = vst [vmem:[#allocation2 + $0x230] sm:$0xff] %v473
    %478 = vst [vmem:[#allocation2 + $0x238] sm:$0xff] %v474
    %v479 = vld [vmem:[%s2] sm:$0xff]
    %v480 = vld [vmem:[%s2 + $0x8] sm:$0xff]
    %v481 = vld [vmem:[%s2 + $0x10] sm:$0xff]
    %v482 = vld [vmem:[%s2 + $0x18] sm:$0xff]
    %v483 = vld [vmem:[#allocation2] sm:$0xff]
    %v484 = vld [vmem:[#allocation2 + $0x8] sm:$0xff]
    %v485 = vld [vmem:[#allocation2 + $0x10] sm:$0xff]
    %v486 = vld [vmem:[#allocation2 + $0x18] sm:$0xff]
    %v487 = vld [vmem:[#allocation2 + $0x20] sm:$0xff]
    %v488 = vld [vmem:[#allocation2 + $0x28] sm:$0xff]
    %v489 = vld [vmem:[#allocation2 + $0x30] sm:$0xff]
    %v490 = vld [vmem:[#allocation2 + $0x38] sm:$0xff]
    %v491 = vld [vmem:[#allocation2 + $0x40] sm:$0xff]
    %v492 = vld [vmem:[#allocation2 + $0x48] sm:$0xff]
    %v493 = vld [vmem:[#allocation2 + $0x50] sm:$0xff]
    %v494 = vld [vmem:[#allocation2 + $0x58] sm:$0xff]
    %v495 = vld [vmem:[#allocation2 + $0x60] sm:$0xff]
    %v496 = vld [vmem:[#allocation2 + $0x68] sm:$0xff]
    %v497 = vld [vmem:[#allocation2 + $0x70] sm:$0xff]
    %v498 = vld [vmem:[#allocation2 + $0x78] sm:$0xff]
    %v499 = vld [vmem:[#allocation2 + $0x80] sm:$0xff]
    %v500 = vld [vmem:[#allocation2 + $0x88] sm:$0xff]
    %v501 = vld [vmem:[#allocation2 + $0x90] sm:$0xff]
    %v502 = vld [vmem:[#allocation2 + $0x98] sm:$0xff]
    %v503 = vld [vmem:[#allocation2 + $0xa0] sm:$0xff]
    %v504 = vld [vmem:[#allocation2 + $0xa8] sm:$0xff]
    %v505 = vld [vmem:[#allocation2 + $0xb0] sm:$0xff]
    %v506 = vld [vmem:[#allocation2 + $0xb8] sm:$0xff]
    %v507 = vld [vmem:[#allocation2 + $0xc0] sm:$0xff]
    %v508 = vld [vmem:[#allocation2 + $0xc8] sm:$0xff]
    %v509 = vld [vmem:[#allocation2 + $0xd0] sm:$0xff]
    %v510 = vld [vmem:[#allocation2 + $0xd8] sm:$0xff]
    %v511 = vld [vmem:[#allocation2 + $0xe0] sm:$0xff]
    %v512 = vld [vmem:[#allocation2 + $0xe8] sm:$0xff]
    %v513 = vld [vmem:[#allocation2 + $0xf0] sm:$0xff]
    %v514 = vld [vmem:[#allocation2 + $0xf8] sm:$0xff]
    %v515 = vld [vmem:[#allocation2 + $0x100] sm:$0xff]
    %v516 = vld [vmem:[#allocation2 + $0x108] sm:$0xff]
    %v517 = vld [vmem:[#allocation2 + $0x110] sm:$0xff]
    %v518 = vld [vmem:[#allocation2 + $0x118] sm:$0xff]
    %v519 = vld [vmem:[#allocation2 + $0x120] sm:$0xff]
    %v520 = vld [vmem:[#allocation2 + $0x128] sm:$0xff]
    %v521 = vld [vmem:[#allocation2 + $0x130] sm:$0xff]
    %v522 = vld [vmem:[#allocation2 + $0x138] sm:$0xff]
    %v523 = vld [vmem:[#allocation2 + $0x140] sm:$0xff]
    %v524 = vld [vmem:[#allocation2 + $0x148] sm:$0xff]
    %v525 = vld [vmem:[#allocation2 + $0x150] sm:$0xff]
    %v526 = vld [vmem:[#allocation2 + $0x158] sm:$0xff]
    %v527 = vld [vmem:[#allocation2 + $0x160] sm:$0xff]
    %v528 = vld [vmem:[#allocation2 + $0x168] sm:$0xff]
    %v529 = vld [vmem:[#allocation2 + $0x170] sm:$0xff]
    %v530 = vld [vmem:[#allocation2 + $0x178] sm:$0xff]
    %v531 = vld [vmem:[#allocation2 + $0x180] sm:$0xff]
    %v532 = vld [vmem:[#allocation2 + $0x188] sm:$0xff]
    %v533 = vld [vmem:[#allocation2 + $0x190] sm:$0xff]
    %v534 = vld [vmem:[#allocation2 + $0x198] sm:$0xff]
    %v535 = vld [vmem:[#allocation2 + $0x1a0] sm:$0xff]
    %v536 = vld [vmem:[#allocation2 + $0x1a8] sm:$0xff]
    %v537 = vld [vmem:[#allocation2 + $0x1b0] sm:$0xff]
    %v538 = vld [vmem:[#allocation2 + $0x1b8] sm:$0xff]
    %v539 = vld [vmem:[#allocation2 + $0x1c0] sm:$0xff]
    %v540 = vld [vmem:[#allocation2 + $0x1c8] sm:$0xff]
    %v541 = vld [vmem:[#allocation2 + $0x1d0] sm:$0xff]
    %v542 = vld [vmem:[#allocation2 + $0x1d8] sm:$0xff]
    %v543 = vld [vmem:[#allocation2 + $0x1e0] sm:$0xff]
    %v544 = vld [vmem:[#allocation2 + $0x1e8] sm:$0xff]
    %v545 = vld [vmem:[#allocation2 + $0x1f0] sm:$0xff]
    %v546 = vld [vmem:[#allocation2 + $0x1f8] sm:$0xff]
    %v547 = vld [vmem:[#allocation2 + $0x200] sm:$0xff]
    %v548 = vld [vmem:[#allocation2 + $0x208] sm:$0xff]
    %v549 = vld [vmem:[#allocation2 + $0x210] sm:$0xff]
    %v550 = vld [vmem:[#allocation2 + $0x218] sm:$0xff]
    %v551 = vld [vmem:[#allocation2 + $0x220] sm:$0xff]
    %v552 = vld [vmem:[#allocation2 + $0x228] sm:$0xff]
    %v553 = vld [vmem:[#allocation2 + $0x230] sm:$0xff]
    %v554 = vld [vmem:[#allocation2 + $0x238] sm:$0xff]
    %v555 = vld [vmem:[%s3] sm:$0xff]
    %v556 = vld [vmem:[%s3 + $0x8] sm:$0xff]
    %558 = vset.pattern.permute.xlu0 0
    %559 = vperm.xlu0 %558, %v555
    %v560 = vpop.permute.xlu0 %559
    %563 = vset.pattern.permute.xlu0 0
    %564 = vperm.xlu0 %563, %v556
    %v565 = vpop.permute.xlu0 %564
    %vm567 = vcmask 130048
    %v569 = vsel %vm567, %v480, 0
    %v572 = vsel %vm567, %v482, 0
    %574 = vmatprep.subr.mxu0 %v544
    %575 = vmatpush1.msra.mxu0 %v543
    %576 = vmatprep.subr.mxu0 %v540
    %577 = vmatpush1.msra.mxu0 %v539
    %578 = vmatprep.subr.mxu0 %v536
    %579 = vmatpush1.msra.mxu0 %v535
    %580 = vmatprep.subr.mxu0 %v532
    %581 = vmatpush1.msra.mxu0 %v531
    %582 = vmatprep.subr.mxu0 %v528
    %583 = vmatpush1.msra.mxu0 %v527
    %584 = vmatprep.subr.mxu0 %v524
    %585 = vmatpush1.msra.mxu0 %v523
    %586 = vmatprep.subr.mxu0 %v520
    %587 = vmatpush1.msra.mxu0 %v519
    %588 = vmatprep.subr.mxu0 %v516
    %589 = vmatpush1.msra.mxu0 %v515
    %590 = vmatprep.subr.mxu0 %v512
    %591 = vmatpush1.msra.mxu0 %v511
    %592 = vmatprep.subr.mxu0 %v508
    %593 = vmatpush1.msra.mxu0 %v507
    %594 = vmatprep.subr.mxu0 %v504
    %595 = vmatpush1.msra.mxu0 %v503
    %596 = vmatprep.subr.mxu0 %v500
    %597 = vmatpush1.msra.mxu0 %v499
    %598 = vmatprep.subr.mxu0 %v496
    %599 = vmatpush1.msra.mxu0 %v495
    %600 = vmatprep.subr.mxu0 %v492
    %601 = vmatpush1.msra.mxu0 %v491
    %602 = vmatprep.subr.mxu0 %v488
    %603 = vmatpush1.msra.mxu0 %v487
    %604 = vmatprep.subr.mxu0 %v484
    %605 = vmatpush1.msra.mxu0 %v483
    %606 = vmatprep.subr.mxu0 0.0
    %607 = vmatpush2.msra.mxu0 0.0
    %608 = vmatprep.subr.mxu0 0.0
    %609 = vmatpush2.msra.mxu0 0.0
    %610 = vmatprep.subr.mxu0 0.0
    %611 = vmatpush2.msra.mxu0 0.0
    %612 = vmatprep.subr.mxu0 0.0
    %613 = vmatpush2.msra.mxu0 0.0
    %614 = vmatprep.subr.mxu0 0.0
    %615 = vmatpush2.msra.mxu0 0.0
    %616 = vmatprep.subr.mxu0 0.0
    %617 = vmatpush2.msra.mxu0 0.0
    %618 = vmatprep.subr.mxu0 0.0
    %619 = vmatpush2.msra.mxu0 0.0
    %620 = vmatprep.subr.mxu0 0.0
    %621 = vmatpush2.msra.mxu0 0.0
    %622 = vmatprep.subr.mxu0 0.0
    %623 = vmatpush2.msra.mxu0 0.0
    %624 = vmatprep.subr.mxu0 0.0
    %625 = vmatpush2.msra.mxu0 0.0
    %626 = vmatprep.subr.mxu0 0.0
    %627 = vmatpush2.msra.mxu0 0.0
    %628 = vmatprep.subr.mxu0 0.0
    %629 = vmatpush2.msra.mxu0 0.0
    %630 = vmatprep.subr.mxu0 0.0
    %631 = vmatpush2.msra.mxu0 0.0
    %632 = vmatprep.subr.mxu0 0.0
    %633 = vmatpush2.msra.mxu0 0.0
    %634 = vmatprep.subr.mxu0 %v552
    %635 = vmatpush2.msra.mxu0 %v551
    %636 = vmatprep.subr.mxu0 %v548
    %637 = vmatpush2.msra.mxu0 %v547
    %638 = vmatprep.mubr.f32.mxu0 %v569
    %639 = vmatmul.mubr.f32.gmra.mxu0 %v479
    %v640 = vpop.f32.mrf.mxu0
    %v641 = vadd.f32 %v560, %v640
    %v642 = vpop.f32.mrf.mxu0
    %v643 = vadd.f32 %v560, %v642
    %644 = vmatprep.mubr.f32.mxu0 %v572
    %645 = vmatmul.mubr.f32.gmra.mxu0 %v481
    %v646 = vpop.f32.mrf.mxu0
    %v647 = vadd.f32 %v565, %v646
    %v648 = vpop.f32.mrf.mxu0
    %v649 = vadd.f32 %v565, %v648
    %650 = vdwg.mxu0
    %651 = vmatprep.subr.mxu0 %v546
    %652 = vmatpush1.msra.mxu0 %v545
    %653 = vmatprep.subr.mxu0 %v542
    %654 = vmatpush1.msra.mxu0 %v541
    %655 = vmatprep.subr.mxu0 %v538
    %656 = vmatpush1.msra.mxu0 %v537
    %657 = vmatprep.subr.mxu0 %v534
    %658 = vmatpush1.msra.mxu0 %v533
    %659 = vmatprep.subr.mxu0 %v530
    %660 = vmatpush1.msra.mxu0 %v529
    %661 = vmatprep.subr.mxu0 %v526
    %662 = vmatpush1.msra.mxu0 %v525
    %663 = vmatprep.subr.mxu0 %v522
    %664 = vmatpush1.msra.mxu0 %v521
    %665 = vmatprep.subr.mxu0 %v518
    %666 = vmatpush1.msra.mxu0 %v517
    %667 = vmatprep.subr.mxu0 %v514
    %668 = vmatpush1.msra.mxu0 %v513
    %669 = vmatprep.subr.mxu0 %v510
    %670 = vmatpush1.msra.mxu0 %v509
    %671 = vmatprep.subr.mxu0 %v506
    %672 = vmatpush1.msra.mxu0 %v505
    %673 = vmatprep.subr.mxu0 %v502
    %674 = vmatpush1.msra.mxu0 %v501
    %675 = vmatprep.subr.mxu0 %v498
    %676 = vmatpush1.msra.mxu0 %v497
    %677 = vmatprep.subr.mxu0 %v494
    %678 = vmatpush1.msra.mxu0 %v493
    %679 = vmatprep.subr.mxu0 %v490
    %680 = vmatpush1.msra.mxu0 %v489
    %681 = vmatprep.subr.mxu0 %v486
    %682 = vmatpush1.msra.mxu0 %v485
    %683 = vmatprep.subr.mxu0 0.0
    %684 = vmatpush2.msra.mxu0 0.0
    %685 = vmatprep.subr.mxu0 0.0
    %686 = vmatpush2.msra.mxu0 0.0
    %687 = vmatprep.subr.mxu0 0.0
    %688 = vmatpush2.msra.mxu0 0.0
    %689 = vmatprep.subr.mxu0 0.0
    %690 = vmatpush2.msra.mxu0 0.0
    %691 = vmatprep.subr.mxu0 0.0
    %692 = vmatpush2.msra.mxu0 0.0
    %693 = vmatprep.subr.mxu0 0.0
    %694 = vmatpush2.msra.mxu0 0.0
    %695 = vmatprep.subr.mxu0 0.0
    %696 = vmatpush2.msra.mxu0 0.0
    %697 = vmatprep.subr.mxu0 0.0
    %698 = vmatpush2.msra.mxu0 0.0
    %699 = vmatprep.subr.mxu0 0.0
    %700 = vmatpush2.msra.mxu0 0.0
    %701 = vmatprep.subr.mxu0 0.0
    %702 = vmatpush2.msra.mxu0 0.0
    %703 = vmatprep.subr.mxu0 0.0
    %704 = vmatpush2.msra.mxu0 0.0
    %705 = vmatprep.subr.mxu0 0.0
    %706 = vmatpush2.msra.mxu0 0.0
    %707 = vmatprep.subr.mxu0 0.0
    %708 = vmatpush2.msra.mxu0 0.0
    %709 = vmatprep.subr.mxu0 0.0
    %710 = vmatpush2.msra.mxu0 0.0
    %711 = vmatprep.subr.mxu0 %v554
    %712 = vmatpush2.msra.mxu0 %v553
    %713 = vmatprep.subr.mxu0 %v550
    %714 = vmatpush2.msra.mxu0 %v549
    %715 = vmatprep.mubr.f32.mxu0 %v569
    %716 = vmatmul.mubr.f32.gmra.mxu0 %v479
    %v717 = vpop.f32.mrf.mxu0
    %v718 = vadd.f32 %v560, %v717
    %v719 = vpop.f32.mrf.mxu0
    %v720 = vadd.f32 %v560, %v719
    %721 = vmatprep.mubr.f32.mxu0 %v572
    %722 = vmatmul.mubr.f32.gmra.mxu0 %v481
    %v723 = vpop.f32.mrf.mxu0
    %v724 = vadd.f32 %v565, %v723
    %v725 = vpop.f32.mrf.mxu0
    %v726 = vadd.f32 %v565, %v725
    %727 = vdwg.mxu0
    %v728 = vmax.f32 %v641, 0.0
    %v729 = vmax.f32 %v643, 0.0
    %v730 = vmax.f32 %v718, 0.0
    %v731 = vmax.f32 %v720, 0.0
    %v732 = vmax.f32 %v647, 0.0
    %v733 = vmax.f32 %v649, 0.0
    %v734 = vmax.f32 %v724, 0.0
    %v735 = vmax.f32 %v726, 0.0
    %736 = vrot.lane.b32.xlu0 %v728, 16
    %v737 = vpop.permute.xlu0 %736
    %738 = vrot.lane.b32.xlu0 %v732, 16
    %v739 = vpop.permute.xlu0 %738
    %740 = vrot.lane.b32.xlu0 %v729, 16
    %v741 = vpop.permute.xlu0 %740
    %742 = vrot.lane.b32.xlu0 %v733, 16
    %v743 = vpop.permute.xlu0 %742
    %v744 = vsel %vm79, %v737, %v741
    %v745 = vsel %vm79, %v739, %v743
    %v746 = vsel %vm79, %v741, %v737
    %v747 = vsel %vm79, %v743, %v739
    %748 = vrot.lane.b32.xlu0 %v728, 112
    %v749 = vpop.permute.xlu0 %748
    %750 = vrot.lane.b32.xlu0 %v732, 112
    %v751 = vpop.permute.xlu0 %750
    %752 = vrot.lane.b32.xlu0 %v729, 112
    %v753 = vpop.permute.xlu0 %752
    %754 = vrot.lane.b32.xlu0 %v733, 112
    %v755 = vpop.permute.xlu0 %754
    %v756 = vsel %vm92, %v749, %v753
    %v757 = vsel %vm92, %v751, %v755
    %v758 = vsel %vm92, %v753, %v749
    %v759 = vsel %vm92, %v755, %v751
    %760 = vrot.lane.b32.xlu0 %v746, 1
    %v761 = vpop.permute.xlu0 %760
    %762 = vrot.lane.b32.xlu0 %v747, 1
    %v763 = vpop.permute.xlu0 %762
    %764 = vrot.lane.b32.xlu0 %v744, 1
    %v765 = vpop.permute.xlu0 %764
    %766 = vrot.lane.b32.xlu0 %v745, 1
    %v767 = vpop.permute.xlu0 %766
    %v768 = vsel %vm105, %v761, %v765
    %v769 = vsel %vm105, %v763, %v767
    %v770 = vsel %vm105, %v765, %v761
    %v771 = vsel %vm105, %v767, %v763
    %v772 = vld [vmem:[#allocation6] sm:$0xff]
    %v773 = vld [vmem:[#allocation6 + $0x8] sm:$0xff]
    %v774 = vld [vmem:[#allocation6 + $0x10] sm:$0xff]
    %v775 = vld [vmem:[#allocation6 + $0x18] sm:$0xff]
    %v776 = vmul.f32 %v770, %v772
    %v777 = vmul.f32 %v768, %v773
    %v778 = vmul.f32 %v771, %v774
    %v779 = vmul.f32 %v769, %v775
    %780 = vst [vmem:[#allocation2] sm:$0xff] %v776
    %781 = vst [vmem:[#allocation2 + $0x8] sm:$0xff] %v777
    %782 = vst [vmem:[#allocation2 + $0x20] sm:$0xff] %v778
    %783 = vst [vmem:[#allocation2 + $0x28] sm:$0xff] %v779
    %v784 = vld [vmem:[%s122] sm:$0xff]
    %v785 = vld [vmem:[%s122 + $0x8] sm:$0xff]
    %v786 = vld [vmem:[%s122 + $0x10] sm:$0xff]
    %v787 = vld [vmem:[%s122 + $0x18] sm:$0xff]
    %v788 = vmul.f32 %v746, %v784
    %v789 = vmul.f32 %v744, %v785
    %v790 = vmul.f32 %v747, %v786
    %v791 = vmul.f32 %v745, %v787
    %792 = vst [vmem:[#allocation2 + $0x40] sm:$0xff] %v788
    %793 = vst [vmem:[#allocation2 + $0x48] sm:$0xff] %v789
    %794 = vst [vmem:[#allocation2 + $0x60] sm:$0xff] %v790
    %795 = vst [vmem:[#allocation2 + $0x68] sm:$0xff] %v791
    %796 = vrot.lane.b32.xlu0 %v746, 127
    %v797 = vpop.permute.xlu0 %796
    %798 = vrot.lane.b32.xlu0 %v747, 127
    %v799 = vpop.permute.xlu0 %798
    %800 = vrot.lane.b32.xlu0 %v744, 127
    %v801 = vpop.permute.xlu0 %800
    %802 = vrot.lane.b32.xlu0 %v745, 127
    %v803 = vpop.permute.xlu0 %802
    %v804 = vsel %vm143, %v797, %v801
    %v805 = vsel %vm143, %v799, %v803
    %v806 = vsel %vm143, %v801, %v797
    %v807 = vsel %vm143, %v803, %v799
    %v808 = vld [vmem:[%s148] sm:$0xff]
    %v809 = vld [vmem:[%s148 + $0x8] sm:$0xff]
    %v810 = vld [vmem:[%s148 + $0x10] sm:$0xff]
    %v811 = vld [vmem:[%s148 + $0x18] sm:$0xff]
    %v812 = vmul.f32 %v804, %v808
    %v813 = vmul.f32 %v806, %v809
    %v814 = vmul.f32 %v805, %v810
    %v815 = vmul.f32 %v807, %v811
    %816 = vst [vmem:[#allocation2 + $0x80] sm:$0xff] %v812
    %817 = vst [vmem:[#allocation2 + $0x88] sm:$0xff] %v813
    %818 = vst [vmem:[#allocation2 + $0xa0] sm:$0xff] %v814
    %819 = vst [vmem:[#allocation2 + $0xa8] sm:$0xff] %v815
    %820 = vrot.lane.b32.xlu0 %v728, 1
    %v821 = vpop.permute.xlu0 %820
    %822 = vrot.lane.b32.xlu0 %v732, 1
    %v823 = vpop.permute.xlu0 %822
    %824 = vrot.lane.b32.xlu0 %v729, 1
    %v825 = vpop.permute.xlu0 %824
    %826 = vrot.lane.b32.xlu0 %v733, 1
    %v827 = vpop.permute.xlu0 %826
    %v828 = vsel %vm105, %v821, %v825
    %v829 = vsel %vm105, %v823, %v827
    %v830 = vsel %vm105, %v825, %v821
    %v831 = vsel %vm105, %v827, %v823
    %v832 = vld [vmem:[%s173] sm:$0xff]
    %v833 = vld [vmem:[%s173 + $0x8] sm:$0xff]
    %v834 = vld [vmem:[%s173 + $0x10] sm:$0xff]
    %v835 = vld [vmem:[%s173 + $0x18] sm:$0xff]
    %v836 = vmul.f32 %v830, %v832
    %v837 = vmul.f32 %v828, %v833
    %v838 = vmul.f32 %v831, %v834
    %v839 = vmul.f32 %v829, %v835
    %840 = vst [vmem:[#allocation2 + $0xc0] sm:$0xff] %v836
    %841 = vst [vmem:[#allocation2 + $0xc8] sm:$0xff] %v837
    %842 = vst [vmem:[#allocation2 + $0xe0] sm:$0xff] %v838
    %843 = vst [vmem:[#allocation2 + $0xe8] sm:$0xff] %v839
    %844 = vst [vmem:[#allocation2 + $0x100] sm:$0xff] %v728
    %845 = vst [vmem:[#allocation2 + $0x108] sm:$0xff] %v729
    %846 = vst [vmem:[#allocation2 + $0x120] sm:$0xff] %v732
    %847 = vst [vmem:[#allocation2 + $0x128] sm:$0xff] %v733
    %848 = vrot.lane.b32.xlu0 %v728, 127
    %v849 = vpop.permute.xlu0 %848
    %850 = vrot.lane.b32.xlu0 %v732, 127
    %v851 = vpop.permute.xlu0 %850
    %852 = vrot.lane.b32.xlu0 %v729, 127
    %v853 = vpop.permute.xlu0 %852
    %854 = vrot.lane.b32.xlu0 %v733, 127
    %v855 = vpop.permute.xlu0 %854
    %v856 = vsel %vm143, %v849, %v853
    %v857 = vsel %vm143, %v851, %v855
    %v858 = vsel %vm143, %v853, %v849
    %v859 = vsel %vm143, %v855, %v851
    %v860 = vld [vmem:[%s202] sm:$0xff]
    %v861 = vld [vmem:[%s202 + $0x8] sm:$0xff]
    %v862 = vld [vmem:[%s202 + $0x10] sm:$0xff]
    %v863 = vld [vmem:[%s202 + $0x18] sm:$0xff]
    %v864 = vmul.f32 %v856, %v860
    %v865 = vmul.f32 %v858, %v861
    %v866 = vmul.f32 %v857, %v862
    %v867 = vmul.f32 %v859, %v863
    %868 = vst [vmem:[#allocation2 + $0x140] sm:$0xff] %v864
    %869 = vst [vmem:[#allocation2 + $0x148] sm:$0xff] %v865
    %870 = vst [vmem:[#allocation2 + $0x160] sm:$0xff] %v866
    %871 = vst [vmem:[#allocation2 + $0x168] sm:$0xff] %v867
    %872 = vrot.lane.b32.xlu0 %v756, 1
    %v873 = vpop.permute.xlu0 %872
    %874 = vrot.lane.b32.xlu0 %v757, 1
    %v875 = vpop.permute.xlu0 %874
    %876 = vrot.lane.b32.xlu0 %v758, 1
    %v877 = vpop.permute.xlu0 %876
    %878 = vrot.lane.b32.xlu0 %v759, 1
    %v879 = vpop.permute.xlu0 %878
    %v880 = vsel %vm105, %v873, %v877
    %v881 = vsel %vm105, %v875, %v879
    %v882 = vsel %vm105, %v877, %v873
    %v883 = vsel %vm105, %v879, %v875
    %v884 = vld [vmem:[%s227] sm:$0xff]
    %v885 = vld [vmem:[%s227 + $0x8] sm:$0xff]
    %v886 = vld [vmem:[%s227 + $0x10] sm:$0xff]
    %v887 = vld [vmem:[%s227 + $0x18] sm:$0xff]
    %v888 = vmul.f32 %v882, %v884
    %v889 = vmul.f32 %v880, %v885
    %v890 = vmul.f32 %v883, %v886
    %v891 = vmul.f32 %v881, %v887
    %892 = vst [vmem:[#allocation2 + $0x180] sm:$0xff] %v888
    %893 = vst [vmem:[#allocation2 + $0x188] sm:$0xff] %v889
    %894 = vst [vmem:[#allocation2 + $0x1a0] sm:$0xff] %v890
    %895 = vst [vmem:[#allocation2 + $0x1a8] sm:$0xff] %v891
    %v896 = vld [vmem:[%s240] sm:$0xff]
    %v897 = vld [vmem:[%s240 + $0x8] sm:$0xff]
    %v898 = vld [vmem:[%s240 + $0x10] sm:$0xff]
    %v899 = vld [vmem:[%s240 + $0x18] sm:$0xff]
    %v900 = vmul.f32 %v756, %v896
    %v901 = vmul.f32 %v758, %v897
    %v902 = vmul.f32 %v757, %v898
    %v903 = vmul.f32 %v759, %v899
    %904 = vst [vmem:[#allocation2 + $0x1c0] sm:$0xff] %v900
    %905 = vst [vmem:[#allocation2 + $0x1c8] sm:$0xff] %v901
    %906 = vst [vmem:[#allocation2 + $0x1e0] sm:$0xff] %v902
    %907 = vst [vmem:[#allocation2 + $0x1e8] sm:$0xff] %v903
    %908 = vrot.lane.b32.xlu0 %v756, 127
    %v909 = vpop.permute.xlu0 %908
    %910 = vrot.lane.b32.xlu0 %v757, 127
    %v911 = vpop.permute.xlu0 %910
    %912 = vrot.lane.b32.xlu0 %v758, 127
    %v913 = vpop.permute.xlu0 %912
    %914 = vrot.lane.b32.xlu0 %v759, 127
    %v915 = vpop.permute.xlu0 %914
    %v916 = vsel %vm143, %v909, %v913
    %v917 = vsel %vm143, %v911, %v915
    %v918 = vsel %vm143, %v913, %v909
    %v919 = vsel %vm143, %v915, %v911
    %v920 = vld [vmem:[%s265] sm:$0xff]
    %v921 = vld [vmem:[%s265 + $0x8] sm:$0xff]
    %v922 = vld [vmem:[%s265 + $0x10] sm:$0xff]
    %v923 = vld [vmem:[%s265 + $0x18] sm:$0xff]
    %v924 = vmul.f32 %v916, %v920
    %v925 = vmul.f32 %v918, %v921
    %v926 = vmul.f32 %v917, %v922
    %v927 = vmul.f32 %v919, %v923
    %928 = vst [vmem:[#allocation2 + $0x200] sm:$0xff] %v924
    %929 = vst [vmem:[#allocation2 + $0x208] sm:$0xff] %v925
    %930 = vst [vmem:[#allocation2 + $0x220] sm:$0xff] %v926
    %931 = vst [vmem:[#allocation2 + $0x228] sm:$0xff] %v927
    %932 = vrot.lane.b32.xlu0 %v730, 16
    %v933 = vpop.permute.xlu0 %932
    %934 = vrot.lane.b32.xlu0 %v734, 16
    %v935 = vpop.permute.xlu0 %934
    %936 = vrot.lane.b32.xlu0 %v731, 16
    %v937 = vpop.permute.xlu0 %936
    %938 = vrot.lane.b32.xlu0 %v735, 16
    %v939 = vpop.permute.xlu0 %938
    %v940 = vsel %vm79, %v933, %v937
    %v941 = vsel %vm79, %v935, %v939
    %v942 = vsel %vm79, %v937, %v933
    %v943 = vsel %vm79, %v939, %v935
    %944 = vrot.lane.b32.xlu0 %v730, 112
    %v945 = vpop.permute.xlu0 %944
    %946 = vrot.lane.b32.xlu0 %v734, 112
    %v947 = vpop.permute.xlu0 %946
    %948 = vrot.lane.b32.xlu0 %v731, 112
    %v949 = vpop.permute.xlu0 %948
    %950 = vrot.lane.b32.xlu0 %v735, 112
    %v951 = vpop.permute.xlu0 %950
    %v952 = vsel %vm92, %v945, %v949
    %v953 = vsel %vm92, %v947, %v951
    %v954 = vsel %vm92, %v949, %v945
    %v955 = vsel %vm92, %v951, %v947
    %956 = vrot.lane.b32.xlu0 %v942, 1
    %v957 = vpop.permute.xlu0 %956
    %958 = vrot.lane.b32.xlu0 %v943, 1
    %v959 = vpop.permute.xlu0 %958
    %960 = vrot.lane.b32.xlu0 %v940, 1
    %v961 = vpop.permute.xlu0 %960
    %962 = vrot.lane.b32.xlu0 %v941, 1
    %v963 = vpop.permute.xlu0 %962
    %v964 = vsel %vm105, %v957, %v961
    %v965 = vsel %vm105, %v959, %v963
    %v966 = vsel %vm105, %v961, %v957
    %v967 = vsel %vm105, %v963, %v959
    %v968 = vld [vmem:[#allocation6] sm:$0xff]
    %v969 = vld [vmem:[#allocation6 + $0x8] sm:$0xff]
    %v970 = vld [vmem:[#allocation6 + $0x10] sm:$0xff]
    %v971 = vld [vmem:[#allocation6 + $0x18] sm:$0xff]
    %v972 = vmul.f32 %v966, %v968
    %v973 = vmul.f32 %v964, %v969
    %v974 = vmul.f32 %v967, %v970
    %v975 = vmul.f32 %v965, %v971
    %976 = vst [vmem:[#allocation2 + $0x10] sm:$0xff] %v972
    %977 = vst [vmem:[#allocation2 + $0x18] sm:$0xff] %v973
    %978 = vst [vmem:[#allocation2 + $0x30] sm:$0xff] %v974
    %979 = vst [vmem:[#allocation2 + $0x38] sm:$0xff] %v975
    %v980 = vld [vmem:[%s122] sm:$0xff]
    %v981 = vld [vmem:[%s122 + $0x8] sm:$0xff]
    %v982 = vld [vmem:[%s122 + $0x10] sm:$0xff]
    %v983 = vld [vmem:[%s122 + $0x18] sm:$0xff]
    %v984 = vmul.f32 %v942, %v980
    %v985 = vmul.f32 %v940, %v981
    %v986 = vmul.f32 %v943, %v982
    %v987 = vmul.f32 %v941, %v983
    %988 = vst [vmem:[#allocation2 + $0x50] sm:$0xff] %v984
    %989 = vst [vmem:[#allocation2 + $0x58] sm:$0xff] %v985
    %990 = vst [vmem:[#allocation2 + $0x70] sm:$0xff] %v986
    %991 = vst [vmem:[#allocation2 + $0x78] sm:$0xff] %v987
    %992 = vrot.lane.b32.xlu0 %v942, 127
    %v993 = vpop.permute.xlu0 %992
    %994 = vrot.lane.b32.xlu0 %v943, 127
    %v995 = vpop.permute.xlu0 %994
    %996 = vrot.lane.b32.xlu0 %v940, 127
    %v997 = vpop.permute.xlu0 %996
    %998 = vrot.lane.b32.xlu0 %v941, 127
    %v999 = vpop.permute.xlu0 %998
    %v1000 = vsel %vm143, %v993, %v997
    %v1001 = vsel %vm143, %v995, %v999
    %v1002 = vsel %vm143, %v997, %v993
    %v1003 = vsel %vm143, %v999, %v995
    %v1004 = vld [vmem:[%s148] sm:$0xff]
    %v1005 = vld [vmem:[%s148 + $0x8] sm:$0xff]
    %v1006 = vld [vmem:[%s148 + $0x10] sm:$0xff]
    %v1007 = vld [vmem:[%s148 + $0x18] sm:$0xff]
    %v1008 = vmul.f32 %v1000, %v1004
    %v1009 = vmul.f32 %v1002, %v1005
    %v1010 = vmul.f32 %v1001, %v1006
    %v1011 = vmul.f32 %v1003, %v1007
    %1012 = vst [vmem:[#allocation2 + $0x90] sm:$0xff] %v1008
    %1013 = vst [vmem:[#allocation2 + $0x98] sm:$0xff] %v1009
    %1014 = vst [vmem:[#allocation2 + $0xb0] sm:$0xff] %v1010
    %1015 = vst [vmem:[#allocation2 + $0xb8] sm:$0xff] %v1011
    %1016 = vrot.lane.b32.xlu0 %v730, 1
    %v1017 = vpop.permute.xlu0 %1016
    %1018 = vrot.lane.b32.xlu0 %v734, 1
    %v1019 = vpop.permute.xlu0 %1018
    %1020 = vrot.lane.b32.xlu0 %v731, 1
    %v1021 = vpop.permute.xlu0 %1020
    %1022 = vrot.lane.b32.xlu0 %v735, 1
    %v1023 = vpop.permute.xlu0 %1022
    %v1024 = vsel %vm105, %v1017, %v1021
    %v1025 = vsel %vm105, %v1019, %v1023
    %v1026 = vsel %vm105, %v1021, %v1017
    %v1027 = vsel %vm105, %v1023, %v1019
    %v1028 = vld [vmem:[%s173] sm:$0xff]
    %v1029 = vld [vmem:[%s173 + $0x8] sm:$0xff]
    %v1030 = vld [vmem:[%s173 + $0x10] sm:$0xff]
    %v1031 = vld [vmem:[%s173 + $0x18] sm:$0xff]
    %v1032 = vmul.f32 %v1026, %v1028
    %v1033 = vmul.f32 %v1024, %v1029
    %v1034 = vmul.f32 %v1027, %v1030
    %v1035 = vmul.f32 %v1025, %v1031
    %1036 = vst [vmem:[#allocation2 + $0xd0] sm:$0xff] %v1032
    %1037 = vst [vmem:[#allocation2 + $0xd8] sm:$0xff] %v1033
    %1038 = vst [vmem:[#allocation2 + $0xf0] sm:$0xff] %v1034
    %1039 = vst [vmem:[#allocation2 + $0xf8] sm:$0xff] %v1035
    %1040 = vst [vmem:[#allocation2 + $0x110] sm:$0xff] %v730
    %1041 = vst [vmem:[#allocation2 + $0x118] sm:$0xff] %v731
    %1042 = vst [vmem:[#allocation2 + $0x130] sm:$0xff] %v734
    %1043 = vst [vmem:[#allocation2 + $0x138] sm:$0xff] %v735
    %1044 = vrot.lane.b32.xlu0 %v730, 127
    %v1045 = vpop.permute.xlu0 %1044
    %1046 = vrot.lane.b32.xlu0 %v734, 127
    %v1047 = vpop.permute.xlu0 %1046
    %1048 = vrot.lane.b32.xlu0 %v731, 127
    %v1049 = vpop.permute.xlu0 %1048
    %1050 = vrot.lane.b32.xlu0 %v735, 127
    %v1051 = vpop.permute.xlu0 %1050
    %v1052 = vsel %vm143, %v1045, %v1049
    %v1053 = vsel %vm143, %v1047, %v1051
    %v1054 = vsel %vm143, %v1049, %v1045
    %v1055 = vsel %vm143, %v1051, %v1047
    %v1056 = vld [vmem:[%s202] sm:$0xff]
    %v1057 = vld [vmem:[%s202 + $0x8] sm:$0xff]
    %v1058 = vld [vmem:[%s202 + $0x10] sm:$0xff]
    %v1059 = vld [vmem:[%s202 + $0x18] sm:$0xff]
    %v1060 = vmul.f32 %v1052, %v1056
    %v1061 = vmul.f32 %v1054, %v1057
    %v1062 = vmul.f32 %v1053, %v1058
    %v1063 = vmul.f32 %v1055, %v1059
    %1064 = vst [vmem:[#allocation2 + $0x150] sm:$0xff] %v1060
    %1065 = vst [vmem:[#allocation2 + $0x158] sm:$0xff] %v1061
    %1066 = vst [vmem:[#allocation2 + $0x170] sm:$0xff] %v1062
    %1067 = vst [vmem:[#allocation2 + $0x178] sm:$0xff] %v1063
    %1068 = vrot.lane.b32.xlu0 %v952, 1
    %v1069 = vpop.permute.xlu0 %1068
    %1070 = vrot.lane.b32.xlu0 %v953, 1
    %v1071 = vpop.permute.xlu0 %1070
    %1072 = vrot.lane.b32.xlu0 %v954, 1
    %v1073 = vpop.permute.xlu0 %1072
    %1074 = vrot.lane.b32.xlu0 %v955, 1
    %v1075 = vpop.permute.xlu0 %1074
    %v1076 = vsel %vm105, %v1069, %v1073
    %v1077 = vsel %vm105, %v1071, %v1075
    %v1078 = vsel %vm105, %v1073, %v1069
    %v1079 = vsel %vm105, %v1075, %v1071
    %v1080 = vld [vmem:[%s227] sm:$0xff]
    %v1081 = vld [vmem:[%s227 + $0x8] sm:$0xff]
    %v1082 = vld [vmem:[%s227 + $0x10] sm:$0xff]
    %v1083 = vld [vmem:[%s227 + $0x18] sm:$0xff]
    %v1084 = vmul.f32 %v1078, %v1080
    %v1085 = vmul.f32 %v1076, %v1081
    %v1086 = vmul.f32 %v1079, %v1082
    %v1087 = vmul.f32 %v1077, %v1083
    %1088 = vst [vmem:[#allocation2 + $0x190] sm:$0xff] %v1084
    %1089 = vst [vmem:[#allocation2 + $0x198] sm:$0xff] %v1085
    %1090 = vst [vmem:[#allocation2 + $0x1b0] sm:$0xff] %v1086
    %1091 = vst [vmem:[#allocation2 + $0x1b8] sm:$0xff] %v1087
    %v1092 = vld [vmem:[%s240] sm:$0xff]
    %v1093 = vld [vmem:[%s240 + $0x8] sm:$0xff]
    %v1094 = vld [vmem:[%s240 + $0x10] sm:$0xff]
    %v1095 = vld [vmem:[%s240 + $0x18] sm:$0xff]
    %v1096 = vmul.f32 %v952, %v1092
    %v1097 = vmul.f32 %v954, %v1093
    %v1098 = vmul.f32 %v953, %v1094
    %v1099 = vmul.f32 %v955, %v1095
    %1100 = vst [vmem:[#allocation2 + $0x1d0] sm:$0xff] %v1096
    %1101 = vst [vmem:[#allocation2 + $0x1d8] sm:$0xff] %v1097
    %1102 = vst [vmem:[#allocation2 + $0x1f0] sm:$0xff] %v1098
    %1103 = vst [vmem:[#allocation2 + $0x1f8] sm:$0xff] %v1099
    %1104 = vrot.lane.b32.xlu0 %v952, 127
    %v1105 = vpop.permute.xlu0 %1104
    %1106 = vrot.lane.b32.xlu0 %v953, 127
    %v1107 = vpop.permute.xlu0 %1106
    %1108 = vrot.lane.b32.xlu0 %v954, 127
    %v1109 = vpop.permute.xlu0 %1108
    %1110 = vrot.lane.b32.xlu0 %v955, 127
    %v1111 = vpop.permute.xlu0 %1110
    %v1112 = vsel %vm143, %v1105, %v1109
    %v1113 = vsel %vm143, %v1107, %v1111
    %v1114 = vsel %vm143, %v1109, %v1105
    %v1115 = vsel %vm143, %v1111, %v1107
    %v1116 = vld [vmem:[%s265] sm:$0xff]
    %v1117 = vld [vmem:[%s265 + $0x8] sm:$0xff]
    %v1118 = vld [vmem:[%s265 + $0x10] sm:$0xff]
    %v1119 = vld [vmem:[%s265 + $0x18] sm:$0xff]
    %v1120 = vmul.f32 %v1112, %v1116
    %v1121 = vmul.f32 %v1114, %v1117
    %v1122 = vmul.f32 %v1113, %v1118
    %v1123 = vmul.f32 %v1115, %v1119
    %1124 = vst [vmem:[#allocation2 + $0x210] sm:$0xff] %v1120
    %1125 = vst [vmem:[#allocation2 + $0x218] sm:$0xff] %v1121
    %1126 = vst [vmem:[#allocation2 + $0x230] sm:$0xff] %v1122
    %1127 = vst [vmem:[#allocation2 + $0x238] sm:$0xff] %v1123
    %v1128 = vld [vmem:[#allocation8] sm:$0xff]
    %v1129 = vld [vmem:[#allocation8 + $0x8] sm:$0xff]
    %v1130 = vld [vmem:[#allocation8 + $0x10] sm:$0xff]
    %v1131 = vld [vmem:[#allocation8 + $0x18] sm:$0xff]
    %v1132 = vld [vmem:[#allocation2] sm:$0xff]
    %v1133 = vld [vmem:[#allocation2 + $0x8] sm:$0xff]
    %v1134 = vld [vmem:[#allocation2 + $0x10] sm:$0xff]
    %v1135 = vld [vmem:[#allocation2 + $0x18] sm:$0xff]
    %v1136 = vld [vmem:[#allocation2 + $0x20] sm:$0xff]
    %v1137 = vld [vmem:[#allocation2 + $0x28] sm:$0xff]
    %v1138 = vld [vmem:[#allocation2 + $0x30] sm:$0xff]
    %v1139 = vld [vmem:[#allocation2 + $0x38] sm:$0xff]
    %v1140 = vld [vmem:[#allocation2 + $0x40] sm:$0xff]
    %v1141 = vld [vmem:[#allocation2 + $0x48] sm:$0xff]
    %v1142 = vld [vmem:[#allocation2 + $0x50] sm:$0xff]
    %v1143 = vld [vmem:[#allocation2 + $0x58] sm:$0xff]
    %v1144 = vld [vmem:[#allocation2 + $0x60] sm:$0xff]
    %v1145 = vld [vmem:[#allocation2 + $0x68] sm:$0xff]
    %v1146 = vld [vmem:[#allocation2 + $0x70] sm:$0xff]
    %v1147 = vld [vmem:[#allocation2 + $0x78] sm:$0xff]
    %v1148 = vld [vmem:[#allocation2 + $0x80] sm:$0xff]
    %v1149 = vld [vmem:[#allocation2 + $0x88] sm:$0xff]
    %v1150 = vld [vmem:[#allocation2 + $0x90] sm:$0xff]
    %v1151 = vld [vmem:[#allocation2 + $0x98] sm:$0xff]
    %v1152 = vld [vmem:[#allocation2 + $0xa0] sm:$0xff]
    %v1153 = vld [vmem:[#allocation2 + $0xa8] sm:$0xff]
    %v1154 = vld [vmem:[#allocation2 + $0xb0] sm:$0xff]
    %v1155 = vld [vmem:[#allocation2 + $0xb8] sm:$0xff]
    %v1156 = vld [vmem:[#allocation2 + $0xc0] sm:$0xff]
    %v1157 = vld [vmem:[#allocation2 + $0xc8] sm:$0xff]
    %v1158 = vld [vmem:[#allocation2 + $0xd0] sm:$0xff]
    %v1159 = vld [vmem:[#allocation2 + $0xd8] sm:$0xff]
    %v1160 = vld [vmem:[#allocation2 + $0xe0] sm:$0xff]
    %v1161 = vld [vmem:[#allocation2 + $0xe8] sm:$0xff]
    %v1162 = vld [vmem:[#allocation2 + $0xf0] sm:$0xff]
    %v1163 = vld [vmem:[#allocation2 + $0xf8] sm:$0xff]
    %v1164 = vld [vmem:[#allocation2 + $0x100] sm:$0xff]
    %v1165 = vld [vmem:[#allocation2 + $0x108] sm:$0xff]
    %v1166 = vld [vmem:[#allocation2 + $0x110] sm:$0xff]
    %v1167 = vld [vmem:[#allocation2 + $0x118] sm:$0xff]
    %v1168 = vld [vmem:[#allocation2 + $0x120] sm:$0xff]
    %v1169 = vld [vmem:[#allocation2 + $0x128] sm:$0xff]
    %v1170 = vld [vmem:[#allocation2 + $0x130] sm:$0xff]
    %v1171 = vld [vmem:[#allocation2 + $0x138] sm:$0xff]
    %v1172 = vld [vmem:[#allocation2 + $0x140] sm:$0xff]
    %v1173 = vld [vmem:[#allocation2 + $0x148] sm:$0xff]
    %v1174 = vld [vmem:[#allocation2 + $0x150] sm:$0xff]
    %v1175 = vld [vmem:[#allocation2 + $0x158] sm:$0xff]
    %v1176 = vld [vmem:[#allocation2 + $0x160] sm:$0xff]
    %v1177 = vld [vmem:[#allocation2 + $0x168] sm:$0xff]
    %v1178 = vld [vmem:[#allocation2 + $0x170] sm:$0xff]
    %v1179 = vld [vmem:[#allocation2 + $0x178] sm:$0xff]
    %v1180 = vld [vmem:[#allocation2 + $0x180] sm:$0xff]
    %v1181 = vld [vmem:[#allocation2 + $0x188] sm:$0xff]
    %v1182 = vld [vmem:[#allocation2 + $0x190] sm:$0xff]
    %v1183 = vld [vmem:[#allocation2 + $0x198] sm:$0xff]
    %v1184 = vld [vmem:[#allocation2 + $0x1a0] sm:$0xff]
    %v1185 = vld [vmem:[#allocation2 + $0x1a8] sm:$0xff]
    %v1186 = vld [vmem:[#allocation2 + $0x1b0] sm:$0xff]
    %v1187 = vld [vmem:[#allocation2 + $0x1b8] sm:$0xff]
    %v1188 = vld [vmem:[#allocation2 + $0x1c0] sm:$0xff]
    %v1189 = vld [vmem:[#allocation2 + $0x1c8] sm:$0xff]
    %v1190 = vld [vmem:[#allocation2 + $0x1d0] sm:$0xff]
    %v1191 = vld [vmem:[#allocation2 + $0x1d8] sm:$0xff]
    %v1192 = vld [vmem:[#allocation2 + $0x1e0] sm:$0xff]
    %v1193 = vld [vmem:[#allocation2 + $0x1e8] sm:$0xff]
    %v1194 = vld [vmem:[#allocation2 + $0x1f0] sm:$0xff]
    %v1195 = vld [vmem:[#allocation2 + $0x1f8] sm:$0xff]
    %v1196 = vld [vmem:[#allocation2 + $0x200] sm:$0xff]
    %v1197 = vld [vmem:[#allocation2 + $0x208] sm:$0xff]
    %v1198 = vld [vmem:[#allocation2 + $0x210] sm:$0xff]
    %v1199 = vld [vmem:[#allocation2 + $0x218] sm:$0xff]
    %v1200 = vld [vmem:[#allocation2 + $0x220] sm:$0xff]
    %v1201 = vld [vmem:[#allocation2 + $0x228] sm:$0xff]
    %v1202 = vld [vmem:[#allocation2 + $0x230] sm:$0xff]
    %v1203 = vld [vmem:[#allocation2 + $0x238] sm:$0xff]
    %v1204 = vld [vmem:[%s5] sm:$0xff]
    %v1205 = vld [vmem:[%s5 + $0x8] sm:$0xff]
    %1207 = vset.pattern.permute.xlu0 0
    %1208 = vperm.xlu0 %1207, %v1204
    %v1209 = vpop.permute.xlu0 %1208
    %1212 = vset.pattern.permute.xlu0 0
    %1213 = vperm.xlu0 %1212, %v1205
    %v1214 = vpop.permute.xlu0 %1213
    %v1217 = vsel %vm567, %v1129, 0
    %v1220 = vsel %vm567, %v1131, 0
    %1222 = vmatprep.subr.mxu0 %v1193
    %1223 = vmatpush1.msra.mxu0 %v1192
    %1224 = vmatprep.subr.mxu0 %v1189
    %1225 = vmatpush1.msra.mxu0 %v1188
    %1226 = vmatprep.subr.mxu0 %v1185
    %1227 = vmatpush1.msra.mxu0 %v1184
    %1228 = vmatprep.subr.mxu0 %v1181
    %1229 = vmatpush1.msra.mxu0 %v1180
    %1230 = vmatprep.subr.mxu0 %v1177
    %1231 = vmatpush1.msra.mxu0 %v1176
    %1232 = vmatprep.subr.mxu0 %v1173
    %1233 = vmatpush1.msra.mxu0 %v1172
    %1234 = vmatprep.subr.mxu0 %v1169
    %1235 = vmatpush1.msra.mxu0 %v1168
    %1236 = vmatprep.subr.mxu0 %v1165
    %1237 = vmatpush1.msra.mxu0 %v1164
    %1238 = vmatprep.subr.mxu0 %v1161
    %1239 = vmatpush1.msra.mxu0 %v1160
    %1240 = vmatprep.subr.mxu0 %v1157
    %1241 = vmatpush1.msra.mxu0 %v1156
    %1242 = vmatprep.subr.mxu0 %v1153
    %1243 = vmatpush1.msra.mxu0 %v1152
    %1244 = vmatprep.subr.mxu0 %v1149
    %1245 = vmatpush1.msra.mxu0 %v1148
    %1246 = vmatprep.subr.mxu0 %v1145
    %1247 = vmatpush1.msra.mxu0 %v1144
    %1248 = vmatprep.subr.mxu0 %v1141
    %1249 = vmatpush1.msra.mxu0 %v1140
    %1250 = vmatprep.subr.mxu0 %v1137
    %1251 = vmatpush1.msra.mxu0 %v1136
    %1252 = vmatprep.subr.mxu0 %v1133
    %1253 = vmatpush1.msra.mxu0 %v1132
    %1254 = vmatprep.subr.mxu0 0.0
    %1255 = vmatpush2.msra.mxu0 0.0
    %1256 = vmatprep.subr.mxu0 0.0
    %1257 = vmatpush2.msra.mxu0 0.0
    %1258 = vmatprep.subr.mxu0 0.0
    %1259 = vmatpush2.msra.mxu0 0.0
    %1260 = vmatprep.subr.mxu0 0.0
    %1261 = vmatpush2.msra.mxu0 0.0
    %1262 = vmatprep.subr.mxu0 0.0
    %1263 = vmatpush2.msra.mxu0 0.0
    %1264 = vmatprep.subr.mxu0 0.0
    %1265 = vmatpush2.msra.mxu0 0.0
    %1266 = vmatprep.subr.mxu0 0.0
    %1267 = vmatpush2.msra.mxu0 0.0
    %1268 = vmatprep.subr.mxu0 0.0
    %1269 = vmatpush2.msra.mxu0 0.0
    %1270 = vmatprep.subr.mxu0 0.0
    %1271 = vmatpush2.msra.mxu0 0.0
    %1272 = vmatprep.subr.mxu0 0.0
    %1273 = vmatpush2.msra.mxu0 0.0
    %1274 = vmatprep.subr.mxu0 0.0
    %1275 = vmatpush2.msra.mxu0 0.0
    %1276 = vmatprep.subr.mxu0 0.0
    %1277 = vmatpush2.msra.mxu0 0.0
    %1278 = vmatprep.subr.mxu0 0.0
    %1279 = vmatpush2.msra.mxu0 0.0
    %1280 = vmatprep.subr.mxu0 0.0
    %1281 = vmatpush2.msra.mxu0 0.0
    %1282 = vmatprep.subr.mxu0 %v1201
    %1283 = vmatpush2.msra.mxu0 %v1200
    %1284 = vmatprep.subr.mxu0 %v1197
    %1285 = vmatpush2.msra.mxu0 %v1196
    %1286 = vmatprep.mubr.f32.mxu0 %v1217
    %1287 = vmatmul.mubr.f32.gmra.mxu0 %v1128
    %v1288 = vpop.f32.mrf.mxu0
    %v1289 = vadd.f32 %v1209, %v1288
    %v1290 = vpop.f32.mrf.mxu0
    %v1291 = vadd.f32 %v1209, %v1290
    %1292 = vmatprep.mubr.f32.mxu0 %v1220
    %1293 = vmatmul.mubr.f32.gmra.mxu0 %v1130
    %v1294 = vpop.f32.mrf.mxu0
    %v1295 = vadd.f32 %v1214, %v1294
    %v1296 = vpop.f32.mrf.mxu0
    %v1297 = vadd.f32 %v1214, %v1296
    %1298 = vdwg.mxu0
    %1299 = vmatprep.subr.mxu0 %v1195
    %1300 = vmatpush1.msra.mxu0 %v1194
    %1301 = vmatprep.subr.mxu0 %v1191
    %1302 = vmatpush1.msra.mxu0 %v1190
    %1303 = vmatprep.subr.mxu0 %v1187
    %1304 = vmatpush1.msra.mxu0 %v1186
    %1305 = vmatprep.subr.mxu0 %v1183
    %1306 = vmatpush1.msra.mxu0 %v1182
    %1307 = vmatprep.subr.mxu0 %v1179
    %1308 = vmatpush1.msra.mxu0 %v1178
    %1309 = vmatprep.subr.mxu0 %v1175
    %1310 = vmatpush1.msra.mxu0 %v1174
    %1311 = vmatprep.subr.mxu0 %v1171
    %1312 = vmatpush1.msra.mxu0 %v1170
    %1313 = vmatprep.subr.mxu0 %v1167
    %1314 = vmatpush1.msra.mxu0 %v1166
    %1315 = vmatprep.subr.mxu0 %v1163
    %1316 = vmatpush1.msra.mxu0 %v1162
    %1317 = vmatprep.subr.mxu0 %v1159
    %1318 = vmatpush1.msra.mxu0 %v1158
    %1319 = vmatprep.subr.mxu0 %v1155
    %1320 = vmatpush1.msra.mxu0 %v1154
    %1321 = vmatprep.subr.mxu0 %v1151
    %1322 = vmatpush1.msra.mxu0 %v1150
    %1323 = vmatprep.subr.mxu0 %v1147
    %1324 = vmatpush1.msra.mxu0 %v1146
    %1325 = vmatprep.subr.mxu0 %v1143
    %1326 = vmatpush1.msra.mxu0 %v1142
    %1327 = vmatprep.subr.mxu0 %v1139
    %1328 = vmatpush1.msra.mxu0 %v1138
    %1329 = vmatprep.subr.mxu0 %v1135
    %1330 = vmatpush1.msra.mxu0 %v1134
    %1331 = vmatprep.subr.mxu0 0.0
    %1332 = vmatpush2.msra.mxu0 0.0
    %1333 = vmatprep.subr.mxu0 0.0
    %1334 = vmatpush2.msra.mxu0 0.0
    %1335 = vmatprep.subr.mxu0 0.0
    %1336 = vmatpush2.msra.mxu0 0.0
    %1337 = vmatprep.subr.mxu0 0.0
    %1338 = vmatpush2.msra.mxu0 0.0
    %1339 = vmatprep.subr.mxu0 0.0
    %1340 = vmatpush2.msra.mxu0 0.0
    %1341 = vmatprep.subr.mxu0 0.0
    %1342 = vmatpush2.msra.mxu0 0.0
    %1343 = vmatprep.subr.mxu0 0.0
    %1344 = vmatpush2.msra.mxu0 0.0
    %1345 = vmatprep.subr.mxu0 0.0
    %1346 = vmatpush2.msra.mxu0 0.0
    %1347 = vmatprep.subr.mxu0 0.0
    %1348 = vmatpush2.msra.mxu0 0.0
    %1349 = vmatprep.subr.mxu0 0.0
    %1350 = vmatpush2.msra.mxu0 0.0
    %1351 = vmatprep.subr.mxu0 0.0
    %1352 = vmatpush2.msra.mxu0 0.0
    %1353 = vmatprep.subr.mxu0 0.0
    %1354 = vmatpush2.msra.mxu0 0.0
    %1355 = vmatprep.subr.mxu0 0.0
    %1356 = vmatpush2.msra.mxu0 0.0
    %1357 = vmatprep.subr.mxu0 0.0
    %1358 = vmatpush2.msra.mxu0 0.0
    %1359 = vmatprep.subr.mxu0 %v1203
    %1360 = vmatpush2.msra.mxu0 %v1202
    %1361 = vmatprep.subr.mxu0 %v1199
    %1362 = vmatpush2.msra.mxu0 %v1198
    %1363 = vmatprep.mubr.f32.mxu0 %v1217
    %1364 = vmatmul.mubr.f32.gmra.mxu0 %v1128
    %v1365 = vpop.f32.mrf.mxu0
    %v1366 = vadd.f32 %v1209, %v1365
    %v1367 = vpop.f32.mrf.mxu0
    %v1368 = vadd.f32 %v1209, %v1367
    %1369 = vmatprep.mubr.f32.mxu0 %v1220
    %1370 = vmatmul.mubr.f32.gmra.mxu0 %v1130
    %v1371 = vpop.f32.mrf.mxu0
    %v1372 = vadd.f32 %v1214, %v1371
    %v1373 = vpop.f32.mrf.mxu0
    %v1374 = vadd.f32 %v1214, %v1373
    %1375 = vdwg.mxu0
    %v1376 = vld [vmem:[#allocation3] sm:$0xff]
    %v1377 = vld [vmem:[#allocation3 + $0x8] sm:$0xff]
    %v1378 = vld [vmem:[#allocation3 + $0x10] sm:$0xff]
    %v1379 = vld [vmem:[#allocation3 + $0x18] sm:$0xff]
    %v1380 = vadd.f32 %v1289, %v1376
    %v1381 = vadd.f32 %v1291, %v1377
    %v1382 = vadd.f32 %v1295, %v1378
    %v1383 = vadd.f32 %v1297, %v1379
    %1384 = vst [vmem:[#allocation9] sm:$0xff] %v1380
    %1385 = vst [vmem:[#allocation9 + $0x8] sm:$0xff] %v1381
    %1386 = vst [vmem:[#allocation9 + $0x10] sm:$0xff] %v1382
    %1387 = vst [vmem:[#allocation9 + $0x18] sm:$0xff] %v1383
    %v1388 = vld [vmem:[%s278] sm:$0xff]
    %v1389 = vld [vmem:[%s278 + $0x8] sm:$0xff]
    %v1390 = vld [vmem:[%s278 + $0x10] sm:$0xff]
    %v1391 = vld [vmem:[%s278 + $0x18] sm:$0xff]
    %v1392 = vadd.f32 %v1366, %v1388
    %v1393 = vadd.f32 %v1368, %v1389
    %v1394 = vadd.f32 %v1372, %v1390
    %v1395 = vadd.f32 %v1374, %v1391
    %s1396 = scalar_lea.vmem [#allocation9], 32
    %1397 = vst [vmem:[%s1396] sm:$0xff] %v1392
    %1398 = vst [vmem:[%s1396 + $0x8] sm:$0xff] %v1393
    %1399 = vst [vmem:[%s1396 + $0x10] sm:$0xff] %v1394
    %1400 = vst [vmem:[%s1396 + $0x18] sm:$0xff] %v1395
    // Predicated region
    $region38: #{tpu_custom_call.1} parent=1 // pred_check
      _
    $region39: #{tpu_custom_call.1} parent=1 // pred_check_branch
      %1402 = sbr.rel (0) target = $region41
    $region40: #{tpu_custom_call.1} parent=1 // pred_region
      %s1404 = ssub.s32 1024, 1024
      %1405 = vsyncadd [#allocation5], %s1404
      %s1406 = sshll.u32 [#allocation9], 4
      %s1407 = int_to_ptr.vmem [resolvable:$true] %s1406
      %1412 = dma.vmem_to_hbm [thread:$0]  %s1407, 1024, %s6, [#allocation5], 256, 256, 16
    $region41: #{tpu_custom_call.1} parent=1 // pred_fallthru
      _
    // Predicated region
    $region42: #{tpu_custom_call.1} parent=1 // pred_check
      _
    $region43: #{tpu_custom_call.1} parent=1 // pred_check_branch
      %1414 = sbr.rel (0) target = $region45
    $region44: #{tpu_custom_call.1} parent=1 // pred_region
      %1415 = dma.done [#allocation5], 1024
    $region45: #{tpu_custom_call.1} parent=1 // pred_fallthru
      _
    %1416 = vsyncpa [#allocation4], 1
    %1417 = vsyncpa [#allocation7], 1
    %1418 = vsyncpa [#allocation5], 1

</llo_original>
